<compile_context>
chip_gen: v7x
topology: tpu7x:2x2x1
jax: 0.10.0
libtpu: 0.0.40
codegen_flags: <defaults>
</compile_context>

<pallas_src>
import functools
import math

import jax
import jax.numpy as jnp
from jax.experimental import pallas as pl
from jax.experimental.pallas import tpu as pltpu


_VMEM_LIMIT = 48 * 1024 * 1024     # safe on v5e/v6e (128 MiB phys) and v7x (64 MiB)
_LN_EPS = 1e-5
_LN_FUSE_MAX_K = 2048              # max contraction dim for fused-LN single-K GEMM


# ------------------------------ small helpers ------------------------------ #

def _ru(x, m):
    """Round up to a multiple of m."""
    return ((x + m - 1) // m) * m


def _pad2(a, rows, cols):
    pr, pc = rows - a.shape[0], cols - a.shape[1]
    if pr or pc:
        a = jnp.pad(a, ((0, pr), (0, pc)))
    return a


# ------------------------------- LayerNorm ---------------------------------- #
# Standalone LN is only used as a fallback when the contraction dim is too large
# to fuse LN into the following GEMM.

def _layernorm_kernel(x_ref, g_ref, b_ref, o_ref, *, eps):
    x = x_ref[...].astype(jnp.float32)
    mu = jnp.mean(x, axis=-1, keepdims=True)
    var = jnp.mean(jnp.square(x - mu), axis=-1, keepdims=True)
    y = (x - mu) * jax.lax.rsqrt(var + eps) * g_ref[...] + b_ref[...]
    o_ref[...] = y.astype(o_ref.dtype)


def layer_norm(x, gamma, beta, *, eps=_LN_EPS, tm=512, out_dtype=jnp.bfloat16):
    lead = x.shape[:-1]
    D = x.shape[-1]
    M = int(math.prod(lead))
    tm = min(tm, _ru(M, 8))
    Mp = _ru(M, tm)

    x2 = _pad2(x.reshape(M, D), Mp, D)
    out = pl.pallas_call(
        functools.partial(_layernorm_kernel, eps=eps),
        out_shape=jax.ShapeDtypeStruct((Mp, D), out_dtype),
        grid=(Mp // tm,),
        in_specs=[
            pl.BlockSpec((tm, D), lambda i: (i, 0)),
            pl.BlockSpec((1, D), lambda i: (0, 0)),
            pl.BlockSpec((1, D), lambda i: (0, 0)),
        ],
        out_specs=pl.BlockSpec((tm, D), lambda i: (i, 0)),
        compiler_params=pltpu.CompilerParams(
            dimension_semantics=("parallel",)),
    )(x2, gamma.reshape(1, D).astype(jnp.float32),
      beta.reshape(1, D).astype(jnp.float32))
    return out[:M].reshape(*lead, D)


# ----------------- tiled linear (opt. fused LN / ReLU / residual) ----------- #

def _linear_kernel(*refs, relu, has_res, has_ln, multi_k, k_real, eps):
    it = iter(refs)
    x_ref = next(it)
    w_ref = next(it)
    b_ref = next(it)
    g_ref = next(it) if has_ln else None
    bb_ref = next(it) if has_ln else None
    r_ref = next(it) if has_res else None
    o_ref = next(it)
    xn_ref = next(it) if has_ln else None
    acc_ref = next(it) if multi_k else None

    if has_ln:
        # LayerNorm computed once per row tile (first output-column tile only),
        # cached in VMEM and reused for every j tile.
        @pl.when(pl.program_id(1) == 0)
        def _():
            xf = x_ref[...].astype(jnp.float32)
            inv_k = 1.0 / k_real
            mu = jnp.sum(xf, axis=-1, keepdims=True) * inv_k
            # E[x^2] - mu^2 so zero-padded columns do not perturb the stats.
            var = jnp.sum(xf * xf, axis=-1, keepdims=True) * inv_k - mu * mu
            xn = (xf - mu) * jax.lax.rsqrt(var + eps) * g_ref[...] + bb_ref[...]
            xn_ref[...] = xn.astype(xn_ref.dtype)

        xv = xn_ref[...]
    else:
        xv = x_ref[...]

    def _epilogue(y):
        if relu:
            y = jnp.maximum(y, 0.0)
        if has_res:
            y = y + r_ref[...].astype(jnp.float32)
        o_ref[...] = y.astype(o_ref.dtype)

    if not multi_k:
        # Single K step: no f32 accumulator scratch, no init/writeback gating.
        y = jnp.dot(xv, w_ref[...], preferred_element_type=jnp.float32) + b_ref[...]
        _epilogue(y)
    else:
        k = pl.program_id(2)

        @pl.when(k == 0)
        def _():
            acc_ref[...] = jnp.zeros_like(acc_ref)

        acc_ref[...] += jnp.dot(xv, w_ref[...], preferred_element_type=jnp.float32)

        @pl.when(k == pl.num_programs(2) - 1)
        def _():
            _epilogue(acc_ref[...] + b_ref[...])


def linear(x, w, b, *, relu=False, residual=None, ln=None,
           out_dtype=jnp.bfloat16, tm=1024, tn=512, tk=512):
    """x: (..., K) @ w: (K, N) + b [+ residual], optionally LN(x) fused in."""
    assert not (relu and residual is not None), \
        "relu + fused residual combination is intentionally unsupported"

    lead = x.shape[:-1]
    K = x.shape[-1]
    M = int(math.prod(lead))
    N = w.shape[1]

    if ln is not None and K > _LN_FUSE_MAX_K:
        # Fallback: too large to hold the whole row in one block.
        x = layer_norm(x, ln[0], ln[1], eps=ln[2])
        ln = None

    if ln is not None:
        tk = max(tk, _ru(K, 128))      # fused LN needs the full row in one block

    tm = min(tm, _ru(M, 8))
    tn = min(tn, _ru(N, 128))
    tk = min(tk, _ru(K, 128))
    Mp, Kp, Np = _ru(M, tm), _ru(K, tk), _ru(N, tn)
    multi_k = (Kp // tk) > 1
    has_ln = ln is not None
    has_res = residual is not None

    # TODO(synk): weights are already stored bf16 so the casts below are no-ops;
    # pre-padding weights at param-prep time would also skip the _pad2 copies.
    x2 = _pad2(x.reshape(M, K).astype(jnp.bfloat16), Mp, Kp)
    wp = _pad2(w.astype(jnp.bfloat16), Kp, Np)
    bp = _pad2(b.reshape(1, N).astype(jnp.float32), 1, Np)

    in_specs = [
        pl.BlockSpec((tm, tk), lambda i, j, k: (i, k)),
        pl.BlockSpec((tk, tn), lambda i, j, k: (k, j)),
        pl.BlockSpec((1, tn), lambda i, j, k: (0, j)),
    ]
    args = [x2, wp, bp]

    if has_ln:
        g, bb, eps = ln
        gp = _pad2(g.reshape(1, K).astype(jnp.float32), 1, Kp)
        bbp = _pad2(bb.reshape(1, K).astype(jnp.float32), 1, Kp)
        in_specs += [pl.BlockSpec((1, Kp), lambda i, j, k: (0, 0)),
                     pl.BlockSpec((1, Kp), lambda i, j, k: (0, 0))]
        args += [gp, bbp]
    else:
        eps = 0.0

    if has_res:
        rp = _pad2(residual.reshape(M, N).astype(jnp.bfloat16), Mp, Np)
        in_specs.append(pl.BlockSpec((tm, tn), lambda i, j, k: (i, j)))
        args.append(rp)

    scratch = []
    if has_ln:
        scratch.append(pltpu.VMEM((tm, Kp), jnp.bfloat16))   # cached LN(x) rows
    if multi_k:
        scratch.append(pltpu.VMEM((tm, tn), jnp.float32))    # f32 accumulator

    # With fused LN the xn scratch is reused across j, so j must stay sequential.
    sem = ("parallel", "arbitrary" if has_ln else "parallel", "arbitrary")

    out = pl.pallas_call(
        functools.partial(_linear_kernel, relu=relu, has_res=has_res,
                          has_ln=has_ln, multi_k=multi_k,
                          k_real=float(K), eps=eps),
        out_shape=jax.ShapeDtypeStruct((Mp, Np), out_dtype),
        grid=(Mp // tm, Np // tn, Kp // tk),
        in_specs=in_specs,
        out_specs=pl.BlockSpec((tm, tn), lambda i, j, k: (i, j)),
        scratch_shapes=scratch,
        compiler_params=pltpu.CompilerParams(
            dimension_semantics=sem, vmem_limit_bytes=_VMEM_LIMIT),
    )(*args)
    return out[:M, :N].reshape(*lead, N)


# ----------------------------- fused expand MLP ------------------------------ #

def _expand_kernel(x_ref, w1_ref, b1_ref, w2_ref, b2_ref, r_ref, o_ref, h_ref):
    # First (Hs -> E/2) GEMM computed once per row tile, cached in VMEM and
    # reused across all output-column tiles (the j axis is "arbitrary").
    @pl.when(pl.program_id(1) == 0)
    def _():
        h = jnp.dot(x_ref[...], w1_ref[...],
                    preferred_element_type=jnp.float32) + b1_ref[...]
        h_ref[...] = h.astype(h_ref.dtype)

    y = jnp.dot(h_ref[...], w2_ref[...],
                preferred_element_type=jnp.float32) + b2_ref[...]
    o_ref[...] = (y + r_ref[...].astype(jnp.float32)).astype(o_ref.dtype)


def expand_embed(x, w1, b1, w2, b2, pos, *, tm=512, tn=512):
    """(Linear(Hs->E/2) -> Linear(E/2->E)) + positional embedding, fused."""
    B, S, Hs = x.shape
    E2 = w1.shape[1]
    E = w2.shape[1]
    M = B * S

    tm = min(tm, _ru(M, 8))
    tn = min(tn, _ru(E, 128))
    Mp, Ep = _ru(M, tm), _ru(E, tn)

    x2 = _pad2(x.reshape(M, Hs).astype(jnp.bfloat16), Mp, Hs)
    w1p = w1.astype(jnp.bfloat16)
    b1p = b1.reshape(1, E2).astype(jnp.float32)
    w2p = _pad2(w2.astype(jnp.bfloat16), E2, Ep)
    b2p = _pad2(b2.reshape(1, E).astype(jnp.float32), 1, Ep)
    rp = _pad2(pos.reshape(M, E).astype(jnp.bfloat16), Mp, Ep)

    out = pl.pallas_call(
        _expand_kernel,
        out_shape=jax.ShapeDtypeStruct((Mp, Ep), jnp.bfloat16),
        grid=(Mp // tm, Ep // tn),
        in_specs=[
            pl.BlockSpec((tm, Hs), lambda i, j: (i, 0)),
            pl.BlockSpec((Hs, E2), lambda i, j: (0, 0)),
            pl.BlockSpec((1, E2), lambda i, j: (0, 0)),
            pl.BlockSpec((E2, tn), lambda i, j: (0, j)),
            pl.BlockSpec((1, tn), lambda i, j: (0, j)),
            pl.BlockSpec((tm, tn), lambda i, j: (i, j)),
        ],
        out_specs=pl.BlockSpec((tm, tn), lambda i, j: (i, j)),
        scratch_shapes=[pltpu.VMEM((tm, E2), jnp.bfloat16)],
        compiler_params=pltpu.CompilerParams(
            dimension_semantics=("parallel", "arbitrary"),
            vmem_limit_bytes=_VMEM_LIMIT),
    )(x2, w1p, b1p, w2p, b2p, rp)
    return out[:M, :E].reshape(B, S, E)


# --------------------------- flash causal attention -------------------------- #

def _flash_attn_kernel(q_ref, k_ref, v_ref, o_ref, m_sc, l_sc, acc_sc,
                       *, scale, seq_len, t):
    qi = pl.program_id(1)
    kvi = pl.program_id(2)

    @pl.when(kvi == 0)
    def _():
        m_sc[...] = jnp.full_like(m_sc, -jnp.inf)
        l_sc[...] = jnp.zeros_like(l_sc)
        acc_sc[...] = jnp.zeros_like(acc_sc)

    def step(masked):
        q = q_ref[0, 0] * scale              # fold softmax scale into q (cheap)
        k = k_ref[0, 0]
        v = v_ref[0, 0]
        # q @ k^T without materializing a transpose of K.
        s = jax.lax.dot_general(q, k, (((1,), (1,)), ((), ())),
                                preferred_element_type=jnp.float32)
        if masked:
            row = qi * t + jax.lax.broadcasted_iota(jnp.int32, (t, t), 0)
            col = kvi * t + jax.lax.broadcasted_iota(jnp.int32, (t, t), 1)
            s = jnp.where((col > row) | (col >= seq_len), -1e30, s)
        m_prev = m_sc[...]
        m_new = jnp.maximum(m_prev, jnp.max(s, axis=-1, keepdims=True))
        alpha = jnp.exp(m_prev - m_new)
        p = jnp.exp(s - m_new)
        l_sc[...] = alpha * l_sc[...] + jnp.sum(p, axis=-1, keepdims=True)
        acc_sc[...] = alpha * acc_sc[...] + jnp.dot(
            p.astype(v.dtype), v, preferred_element_type=jnp.float32)
        m_sc[...] = m_new

    # Fully visible KV tiles: no mask arithmetic at all.
    @pl.when(kvi < qi)
    def _():
        step(masked=False)

    # Diagonal tile: causal + padding mask applied here only.
    # (kvi > qi tiles are skipped entirely; their K/V index_maps are clamped so
    #  no DMA is issued for them.)
    @pl.when(kvi == qi)
    def _():
        step(masked=True)

    @pl.when(kvi == pl.num_programs(2) - 1)
    def _():
        inv_l = pl.reciprocal(l_sc[...], approx=True)
        o_ref[0] = (acc_sc[...] * inv_l).astype(o_ref.dtype)


def flash_attention(qkv, *, scale, tile=256):
    """qkv: (3, BH, S, Dh) stacked head-major q/k/v -> (BH, S, Dh), causal."""
    _, BH, S, Dh = qkv.shape
    t = min(tile, _ru(S, 8))
    Sp = _ru(S, t)
    Dhp = _ru(Dh, 128)                 # lane-dense blocks/stores even if Dh < 128

    qkvp = qkv.astype(jnp.bfloat16)
    if Sp != S or Dhp != Dh:
        qkvp = jnp.pad(qkvp, ((0, 0), (0, 0), (0, Sp - S), (0, Dhp - Dh)))

    nkv = Sp // t
    blk = (1, 1, t, Dhp)
    out = pl.pallas_call(
        functools.partial(_flash_attn_kernel, scale=scale, seq_len=S, t=t),
        out_shape=jax.ShapeDtypeStruct((BH, Sp, Dhp), jnp.bfloat16),
        grid=(BH, nkv, nkv),
        in_specs=[
            pl.BlockSpec(blk, lambda b, i, j: (0, b, i, 0)),
            # Clamp KV block index to the causal bound: skipped (above-diagonal)
            # steps map to the already-resident block -> no extra DMA traffic.
            pl.BlockSpec(blk, lambda b, i, j: (1, b, jnp.minimum(i, j), 0)),
            pl.BlockSpec(blk, lambda b, i, j: (2, b, jnp.minimum(i, j), 0)),
        ],
        out_specs=pl.BlockSpec((1, t, Dhp), lambda b, i, j: (b, i, 0)),
        scratch_shapes=[
            pltpu.VMEM((t, 1), jnp.float32),
            pltpu.VMEM((t, 1), jnp.float32),
            pltpu.VMEM((t, Dhp), jnp.float32),
        ],
        compiler_params=pltpu.CompilerParams(
            dimension_semantics=("parallel", "parallel", "arbitrary")),
    )(qkvp, qkvp, qkvp)
    return out[:, :S, :Dh]


# ----------------------------- model glue (JAX) ------------------------------ #

def encoder_layer(x, p, num_heads):
    """nn.TransformerEncoderLayer, norm_first=True, ReLU FFN, dropout=0."""
    B, S, E = x.shape
    Dh = E // num_heads

    # --- self-attention block (pre-norm); LN1 fused into the QKV projection ---
    qkv = linear(x, p["in_proj_w"], p["in_proj_b"],
                 ln=(p["ln1_g"], p["ln1_b"], _LN_EPS))          # (B, S, 3E)

    # TODO(synk): one head-major transpose kept as XLA glue; head-indexed
    # BlockSpecs on the (B,S,3E) tensor are only lane-dense when Dh >= 128.
    qkv_h = (qkv.reshape(B, S, 3, num_heads, Dh)
                 .transpose(2, 0, 3, 1, 4)
                 .reshape(3, B * num_heads, S, Dh))
    attn = flash_attention(qkv_h, scale=1.0 / math.sqrt(Dh))
    attn = (attn.reshape(B, num_heads, S, Dh)
                .transpose(0, 2, 1, 3)
                .reshape(B, S, E))

    # out-projection with fused residual add
    x = linear(attn, p["out_proj_w"], p["out_proj_b"], residual=x)

    # --- feed-forward block; LN2 fused into ff1, residual fused into ff2 ---
    ff = linear(x, p["ff1_w"], p["ff1_b"], relu=True,
                ln=(p["ln2_g"], p["ln2_b"], _LN_EPS))
    x = linear(ff, p["ff2_w"], p["ff2_b"], residual=x)
    return x


def jpt1_forward(x, params, *, num_heads, token_len, vocab_size):
    B, S, H = x.shape
    E = params["pos_emb"].shape[-1]

    # ExpandMethod.LINEAR (two Linears) fused with positional-embedding add
    pos = jnp.broadcast_to(params["pos_emb"][None, :S, :], (B, S, E))
    h = expand_embed(x, params["expand1_w"], params["expand1_b"],
                     params["expand2_w"], params["expand2_b"], pos)

    for lp in params["layers"]:
        h = encoder_layer(h, lp, num_heads)

    # final LayerNorm fused into the (large) fc_out GEMM
    out = linear(h, params["fc_out_w"], params["fc_out_b"],
                 ln=(params["lnf_g"], params["lnf_b"], _LN_EPS),
                 out_dtype=jnp.float32)                          # (B, S, T*V)
    return out.reshape(B, S, token_len, vocab_size)


# --------------------------------- init -------------------------------------- #

def init_params(key, *, vocab_size, seq_len, token_len, embed_dim, num_heads,
                num_layers, hypertoken_size):
    E = embed_dim
    ks = iter(jax.random.split(key, 8 + 8 * num_layers))

    def dense(k, fan_in, fan_out):
        w = (jax.random.normal(k, (fan_in, fan_out), jnp.float32)
             * (1.0 / math.sqrt(fan_in)))
        return w.astype(jnp.bfloat16)

    params = {
        "pos_emb": (jax.random.normal(next(ks), (seq_len, E), jnp.float32)
                    * 0.02).astype(jnp.bfloat16),
        "expand1_w": dense(next(ks), hypertoken_size, E // 2),
        "expand1_b": jnp.zeros((E // 2,), jnp.float32),
        "expand2_w": dense(next(ks), E // 2, E),
        "expand2_b": jnp.zeros((E,), jnp.float32),
        "lnf_g": jnp.ones((E,), jnp.float32),
        "lnf_b": jnp.zeros((E,), jnp.float32),
        "fc_out_w": dense(next(ks), E, token_len * vocab_size),
        "fc_out_b": jnp.zeros((token_len * vocab_size,), jnp.float32),
        "layers": [],
    }
    for _ in range(num_layers):
        lp = {
            "ln1_g": jnp.ones((E,), jnp.float32),
            "ln1_b": jnp.zeros((E,), jnp.float32),
            "in_proj_w": dense(next(ks), E, 3 * E),
            "in_proj_b": jnp.zeros((3 * E,), jnp.float32),
            "out_proj_w": dense(next(ks), E, E),
            "out_proj_b": jnp.zeros((E,), jnp.float32),
            "ln2_g": jnp.ones((E,), jnp.float32),
            "ln2_b": jnp.zeros((E,), jnp.float32),
            "ff1_w": dense(next(ks), E, 4 * E),
            "ff1_b": jnp.zeros((4 * E,), jnp.float32),
            "ff2_w": dense(next(ks), 4 * E, E),
            "ff2_b": jnp.zeros((E,), jnp.float32),
        }
        params["layers"].append(lp)
    return params


# --------------------------------- main --------------------------------------- #

if __name__ == "__main__":
    vocab_size = 16
    seq_len = 8
    token_len = 4
    embed_dim = 32
    num_heads = 4
    num_layers = 2
    hypertoken_size = 8

    key = jax.random.PRNGKey(0)
    kx, kp = jax.random.split(key)
    x = jax.random.normal(kx, (2, seq_len, hypertoken_size), jnp.float32)

    params = init_params(kp, vocab_size=vocab_size, seq_len=seq_len,
                         token_len=token_len, embed_dim=embed_dim,
                         num_heads=num_heads, num_layers=num_layers,
                         hypertoken_size=hypertoken_size)

    fwd = functools.partial(jpt1_forward, num_heads=num_heads,
                            token_len=token_len, vocab_size=vocab_size)
    out = jax.jit(fwd)(x, params)
    out = jax.block_until_ready(out)

    assert out.shape == (2, seq_len, token_len, vocab_size), out.shape
    assert bool(jnp.all(jnp.isfinite(out)))
    print("KERNEL_OK")
</pallas_src>

<mosaic_0001>
module attributes {stable_mosaic.version = 11 : i64} {
  func.func @_expand_kernel(%arg0: i32, %arg1: i32, %arg2: memref<16x8xbf16, #tpu.memory_space<vmem>>, %arg3: memref<8x16xbf16, #tpu.memory_space<vmem>>, %arg4: memref<1x16xf32, #tpu.memory_space<vmem>>, %arg5: memref<16x128xbf16, #tpu.memory_space<vmem>>, %arg6: memref<1x128xf32, #tpu.memory_space<vmem>>, %arg7: memref<16x128xbf16, #tpu.memory_space<vmem>>, %arg8: memref<16x128xbf16, #tpu.memory_space<vmem>>, %arg9: memref<16x16xbf16, #tpu.memory_space<vmem>>) attributes {dimension_semantics = [#tpu.dimension_semantics<parallel>, #tpu.dimension_semantics<arbitrary>], iteration_bounds = array<i64: 1, 1>, scalar_prefetch = 0 : i64, scratch_operands = 1 : i64, tpu.core_type = #tpu.core_type<tc>, window_params = [{transform_indices = @transform_0, window_bounds = array<i64: 16, 8>}, {pipeline_mode = #tpu.pipeline_mode<synchronous>, transform_indices = @transform_1, window_bounds = array<i64: 8, 16>}, {pipeline_mode = #tpu.pipeline_mode<synchronous>, transform_indices = @transform_2, window_bounds = array<i64: 1, 16>}, {transform_indices = @transform_3, window_bounds = array<i64: 16, 128>}, {transform_indices = @transform_4, window_bounds = array<i64: 1, 128>}, {transform_indices = @transform_5, window_bounds = array<i64: 16, 128>}, {transform_indices = @transform_6, window_bounds = array<i64: 16, 128>}]} {
    %c0_i32 = arith.constant 0 : i32
    %0 = arith.cmpi eq, %arg1, %c0_i32 : i32
    %1 = arith.extui %0 : i1 to i32
    %c0_i32_0 = arith.constant 0 : i32
    %2 = arith.cmpi ne, %1, %c0_i32_0 : i32
    scf.if %2 {
      %c0_10 = arith.constant 0 : index
      %c0_11 = arith.constant 0 : index
      %14 = vector.load %arg2[%c0_10, %c0_11] : memref<16x8xbf16, #tpu.memory_space<vmem>>, vector<16x8xbf16>
      %c0_12 = arith.constant 0 : index
      %c0_13 = arith.constant 0 : index
      %15 = vector.load %arg3[%c0_12, %c0_13] : memref<8x16xbf16, #tpu.memory_space<vmem>>, vector<8x16xbf16>
      %cst_14 = arith.constant dense<0.000000e+00> : vector<16x16xf32>
      %16 = tpu.matmul %14, %15, %cst_14 {dimension_numbers = #tpu.dot_dimension_numbers<[1], [0], [0], [1], [0, 0, 1, 1], [], []>} : vector<16x8xbf16>, vector<8x16xbf16>, vector<16x16xf32> -> vector<16x16xf32>
      %c0_15 = arith.constant 0 : index
      %c0_16 = arith.constant 0 : index
      %17 = vector.load %arg4[%c0_15, %c0_16] : memref<1x16xf32, #tpu.memory_space<vmem>>, vector<1x16xf32>
      %18 = vector.broadcast %17 : vector<1x16xf32> to vector<16x16xf32>
      %19 = arith.addf %16, %18 : vector<16x16xf32>
      %20 = arith.truncf %19 : vector<16x16xf32> to vector<16x16xbf16>
      %c0_17 = arith.constant 0 : index
      %c0_18 = arith.constant 0 : index
      %21 = vector.load %arg9[%c0_17, %c0_18] : memref<16x16xbf16, #tpu.memory_space<vmem>>, vector<16x16xbf16>
      tpu.vector_store %arg9[%c0_17, %c0_18], %20 {strides = array<i32>} : memref<16x16xbf16, #tpu.memory_space<vmem>>, vector<16x16xbf16>,
    } else {
    }
    %c0 = arith.constant 0 : index
    %c0_1 = arith.constant 0 : index
    %3 = vector.load %arg9[%c0, %c0_1] : memref<16x16xbf16, #tpu.memory_space<vmem>>, vector<16x16xbf16>
    %c0_2 = arith.constant 0 : index
    %c0_3 = arith.constant 0 : index
    %4 = vector.load %arg5[%c0_2, %c0_3] : memref<16x128xbf16, #tpu.memory_space<vmem>>, vector<16x128xbf16>
    %cst = arith.constant dense<0.000000e+00> : vector<16x128xf32>
    %5 = tpu.matmul %3, %4, %cst {dimension_numbers = #tpu.dot_dimension_numbers<[1], [0], [0], [1], [0, 0, 1, 1], [], []>} : vector<16x16xbf16>, vector<16x128xbf16>, vector<16x128xf32> -> vector<16x128xf32>
    %c0_4 = arith.constant 0 : index
    %c0_5 = arith.constant 0 : index
    %6 = vector.load %arg6[%c0_4, %c0_5] : memref<1x128xf32, #tpu.memory_space<vmem>>, vector<1x128xf32>
    %7 = vector.broadcast %6 : vector<1x128xf32> to vector<16x128xf32>
    %8 = arith.addf %5, %7 : vector<16x128xf32>
    %c0_6 = arith.constant 0 : index
    %c0_7 = arith.constant 0 : index
    %9 = vector.load %arg7[%c0_6, %c0_7] : memref<16x128xbf16, #tpu.memory_space<vmem>>, vector<16x128xbf16>
    %10 = arith.extf %9 : vector<16x128xbf16> to vector<16x128xf32>
    %11 = arith.addf %8, %10 : vector<16x128xf32>
    %12 = arith.truncf %11 : vector<16x128xf32> to vector<16x128xbf16>
    %c0_8 = arith.constant 0 : index
    %c0_9 = arith.constant 0 : index
    %13 = vector.load %arg8[%c0_8, %c0_9] : memref<16x128xbf16, #tpu.memory_space<vmem>>, vector<16x128xbf16>
    tpu.vector_store %arg8[%c0_8, %c0_9], %12 {strides = array<i32>} : memref<16x128xbf16, #tpu.memory_space<vmem>>, vector<16x128xbf16>,
    return
  }
  func.func @transform_0(%arg0: i32, %arg1: i32) -> (i32, i32) {
    %c0_i32 = arith.constant 0 : i32
    %c0_i32_0 = arith.constant 0 : i32
    return %arg0, %c0_i32 : i32, i32
  }
  func.func @transform_1(%arg0: i32, %arg1: i32) -> (i32, i32) {
    %c0_i32 = arith.constant 0 : i32
    %c0_i32_0 = arith.constant 0 : i32
    %c0_i32_1 = arith.constant 0 : i32
    return %c0_i32, %c0_i32_0 : i32, i32
  }
  func.func @transform_2(%arg0: i32, %arg1: i32) -> (i32, i32) {
    %c0_i32 = arith.constant 0 : i32
    %c0_i32_0 = arith.constant 0 : i32
    %c0_i32_1 = arith.constant 0 : i32
    return %c0_i32, %c0_i32_0 : i32, i32
  }
  func.func @transform_3(%arg0: i32, %arg1: i32) -> (i32, i32) {
    %c0_i32 = arith.constant 0 : i32
    %c0_i32_0 = arith.constant 0 : i32
    return %c0_i32, %arg1 : i32, i32
  }
  func.func @transform_4(%arg0: i32, %arg1: i32) -> (i32, i32) {
    %c0_i32 = arith.constant 0 : i32
    %c0_i32_0 = arith.constant 0 : i32
    return %c0_i32, %arg1 : i32, i32
  }
  func.func @transform_5(%arg0: i32, %arg1: i32) -> (i32, i32) {
    %c0_i32 = arith.constant 0 : i32
    return %arg0, %arg1 : i32, i32
  }
  func.func @transform_6(%arg0: i32, %arg1: i32) -> (i32, i32) {
    %c0_i32 = arith.constant 0 : i32
    return %arg0, %arg1 : i32, i32
  }
}

module attributes {stable_mosaic.version = 11 : i64} {
  func.func @_linear_kernel(%arg0: i32, %arg1: i32, %arg2: i32, %arg3: memref<16x128xbf16, #tpu.memory_space<vmem>>, %arg4: memref<128x128xbf16, #tpu.memory_space<vmem>>, %arg5: memref<1x128xf32, #tpu.memory_space<vmem>>, %arg6: memref<1x128xf32, #tpu.memory_space<vmem>>, %arg7: memref<1x128xf32, #tpu.memory_space<vmem>>, %arg8: memref<16x128xbf16, #tpu.memory_space<vmem>>, %arg9: memref<16x128xbf16, #tpu.memory_space<vmem>>) attributes {dimension_semantics = [#tpu.dimension_semantics<parallel>, #tpu.dimension_semantics<arbitrary>, #tpu.dimension_semantics<arbitrary>], iteration_bounds = array<i64: 1, 1, 1>, scalar_prefetch = 0 : i64, scratch_operands = 1 : i64, tpu.core_type = #tpu.core_type<tc>, window_params = [{transform_indices = @transform_0, window_bounds = array<i64: 16, 128>}, {transform_indices = @transform_1, window_bounds = array<i64: 128, 128>}, {transform_indices = @transform_2, window_bounds = array<i64: 1, 128>}, {pipeline_mode = #tpu.pipeline_mode<synchronous>, transform_indices = @transform_3, window_bounds = array<i64: 1, 128>}, {pipeline_mode = #tpu.pipeline_mode<synchronous>, transform_indices = @transform_4, window_bounds = array<i64: 1, 128>}, {transform_indices = @transform_5, window_bounds = array<i64: 16, 128>}]} {
    %c0_i32 = arith.constant 0 : i32
    %0 = arith.cmpi eq, %arg1, %c0_i32 : i32
    %1 = arith.extui %0 : i1 to i32
    %c0_i32_0 = arith.constant 0 : i32
    %2 = arith.cmpi ne, %1, %c0_i32_0 : i32
    scf.if %2 {
      %c0_8 = arith.constant 0 : index
      %c0_9 = arith.constant 0 : index
      %11 = vector.load %arg3[%c0_8, %c0_9] : memref<16x128xbf16, #tpu.memory_space<vmem>>, vector<16x128xbf16>
      %12 = arith.extf %11 : vector<16x128xbf16> to vector<16x128xf32>
      %cst_10 = arith.constant dense<0.000000e+00> : vector<16xf32>
      %13 = vector.multi_reduction <add>, %12, %cst_10 [1] : vector<16x128xf32> to vector<16xf32>
      %14 = vector.shape_cast %13 : vector<16xf32> to vector<16x1xf32>
      %cst_11 = arith.constant 3.125000e-02 : f32
      %15 = vector.broadcast %cst_11 : f32 to vector<16x1xf32>
      %16 = arith.mulf %14, %15 : vector<16x1xf32>
      %17 = arith.mulf %12, %12 : vector<16x128xf32>
      %cst_12 = arith.constant dense<0.000000e+00> : vector<16xf32>
      %18 = vector.multi_reduction <add>, %17, %cst_12 [1] : vector<16x128xf32> to vector<16xf32>
      %19 = vector.shape_cast %18 : vector<16xf32> to vector<16x1xf32>
      %cst_13 = arith.constant 3.125000e-02 : f32
      %20 = vector.broadcast %cst_13 : f32 to vector<16x1xf32>
      %21 = arith.mulf %19, %20 : vector<16x1xf32>
      %22 = arith.mulf %16, %16 : vector<16x1xf32>
      %23 = arith.subf %21, %22 : vector<16x1xf32>
      %24 = vector.broadcast %16 : vector<16x1xf32> to vector<16x128xf32>
      %25 = arith.subf %12, %24 : vector<16x128xf32>
      %cst_14 = arith.constant 9.99999974E-6 : f32
      %26 = vector.broadcast %cst_14 : f32 to vector<16x1xf32>
      %27 = arith.addf %23, %26 : vector<16x1xf32>
      %28 = math.rsqrt %27 : vector<16x1xf32>
      %29 = vector.broadcast %28 : vector<16x1xf32> to vector<16x128xf32>
      %30 = arith.mulf %25, %29 : vector<16x128xf32>
      %c0_15 = arith.constant 0 : index
      %c0_16 = arith.constant 0 : index
      %31 = vector.load %arg6[%c0_15, %c0_16] : memref<1x128xf32, #tpu.memory_space<vmem>>, vector<1x128xf32>
      %32 = vector.broadcast %31 : vector<1x128xf32> to vector<16x128xf32>
      %33 = arith.mulf %30, %32 : vector<16x128xf32>
      %c0_17 = arith.constant 0 : index
      %c0_18 = arith.constant 0 : index
      %34 = vector.load %arg7[%c0_17, %c0_18] : memref<1x128xf32, #tpu.memory_space<vmem>>, vector<1x128xf32>
      %35 = vector.broadcast %34 : vector<1x128xf32> to vector<16x128xf32>
      %36 = arith.addf %33, %35 : vector<16x128xf32>
      %37 = arith.truncf %36 : vector<16x128xf32> to vector<16x128xbf16>
      %c0_19 = arith.constant 0 : index
      %c0_20 = arith.constant 0 : index
      %38 = vector.load %arg9[%c0_19, %c0_20] : memref<16x128xbf16, #tpu.memory_space<vmem>>, vector<16x128xbf16>
      tpu.vector_store %arg9[%c0_19, %c0_20], %37 {strides = array<i32>} : memref<16x128xbf16, #tpu.memory_space<vmem>>, vector<16x128xbf16>,
    } else {
    }
    %c0 = arith.constant 0 : index
    %c0_1 = arith.constant 0 : index
    %3 = vector.load %arg9[%c0, %c0_1] : memref<16x128xbf16, #tpu.memory_space<vmem>>, vector<16x128xbf16>
    %c0_2 = arith.constant 0 : index
    %c0_3 = arith.constant 0 : index
    %4 = vector.load %arg4[%c0_2, %c0_3] : memref<128x128xbf16, #tpu.memory_space<vmem>>, vector<128x128xbf16>
    %cst = arith.constant dense<0.000000e+00> : vector<16x128xf32>
    %5 = tpu.matmul %3, %4, %cst {dimension_numbers = #tpu.dot_dimension_numbers<[1], [0], [0], [1], [0, 0, 1, 1], [], []>} : vector<16x128xbf16>, vector<128x128xbf16>, vector<16x128xf32> -> vector<16x128xf32>
    %c0_4 = arith.constant 0 : index
    %c0_5 = arith.constant 0 : index
    %6 = vector.load %arg5[%c0_4, %c0_5] : memref<1x128xf32, #tpu.memory_space<vmem>>, vector<1x128xf32>
    %7 = vector.broadcast %6 : vector<1x128xf32> to vector<16x128xf32>
    %8 = arith.addf %5, %7 : vector<16x128xf32>
    %9 = arith.truncf %8 : vector<16x128xf32> to vector<16x128xbf16>
    %c0_6 = arith.constant 0 : index
    %c0_7 = arith.constant 0 : index
    %10 = vector.load %arg8[%c0_6, %c0_7] : memref<16x128xbf16, #tpu.memory_space<vmem>>, vector<16x128xbf16>
    tpu.vector_store %arg8[%c0_6, %c0_7], %9 {strides = array<i32>} : memref<16x128xbf16, #tpu.memory_space<vmem>>, vector<16x128xbf16>,
    return
  }
  func.func @transform_0(%arg0: i32, %arg1: i32, %arg2: i32) -> (i32, i32) {
    %c0_i32 = arith.constant 0 : i32
    return %arg0, %arg2 : i32, i32
  }
  func.func @transform_1(%arg0: i32, %arg1: i32, %arg2: i32) -> (i32, i32) {
    %c0_i32 = arith.constant 0 : i32
    return %arg2, %arg1 : i32, i32
  }
  func.func @transform_2(%arg0: i32, %arg1: i32, %arg2: i32) -> (i32, i32) {
    %c0_i32 = arith.constant 0 : i32
    %c0_i32_0 = arith.constant 0 : i32
    return %c0_i32, %arg1 : i32, i32
  }
  func.func @transform_3(%arg0: i32, %arg1: i32, %arg2: i32) -> (i32, i32) {
    %c0_i32 = arith.constant 0 : i32
    %c0_i32_0 = arith.constant 0 : i32
    %c0_i32_1 = arith.constant 0 : i32
    return %c0_i32, %c0_i32_0 : i32, i32
  }
  func.func @transform_4(%arg0: i32, %arg1: i32, %arg2: i32) -> (i32, i32) {
    %c0_i32 = arith.constant 0 : i32
    %c0_i32_0 = arith.constant 0 : i32
    %c0_i32_1 = arith.constant 0 : i32
    return %c0_i32, %c0_i32_0 : i32, i32
  }
  func.func @transform_5(%arg0: i32, %arg1: i32, %arg2: i32) -> (i32, i32) {
    %c0_i32 = arith.constant 0 : i32
    return %arg0, %arg1 : i32, i32
  }
}

module attributes {stable_mosaic.version = 11 : i64} {
  func.func @_flash_attn_kernel(%arg0: i32, %arg1: i32, %arg2: i32, %arg3: memref<1x1x8x128xbf16, #tpu.memory_space<vmem>>, %arg4: memref<1x1x8x128xbf16, #tpu.memory_space<vmem>>, %arg5: memref<1x1x8x128xbf16, #tpu.memory_space<vmem>>, %arg6: memref<1x8x128xbf16, #tpu.memory_space<vmem>>, %arg7: memref<8x1xf32, #tpu.memory_space<vmem>>, %arg8: memref<8x1xf32, #tpu.memory_space<vmem>>, %arg9: memref<8x128xf32, #tpu.memory_space<vmem>>) attributes {dimension_semantics = [#tpu.dimension_semantics<parallel>, #tpu.dimension_semantics<parallel>, #tpu.dimension_semantics<arbitrary>], iteration_bounds = array<i64: 8, 1, 1>, scalar_prefetch = 0 : i64, scratch_operands = 3 : i64, tpu.core_type = #tpu.core_type<tc>, window_params = [{transform_indices = @transform_0, window_bounds = array<i64: 1, 1, 8, 128>}, {transform_indices = @transform_1, window_bounds = array<i64: 1, 1, 8, 128>}, {transform_indices = @transform_2, window_bounds = array<i64: 1, 1, 8, 128>}, {transform_indices = @transform_3, window_bounds = array<i64: 1, 8, 128>}]} {
    %c0_i32 = arith.constant 0 : i32
    %0 = arith.cmpi eq, %arg2, %c0_i32 : i32
    %1 = arith.extui %0 : i1 to i32
    %c0_i32_0 = arith.constant 0 : i32
    %2 = arith.cmpi ne, %1, %c0_i32_0 : i32
    scf.if %2 {
      %cst = arith.constant 0xFF800000 : f32
      %12 = vector.broadcast %cst : f32 to vector<8x1xf32>
      %c0 = arith.constant 0 : index
      %c0_5 = arith.constant 0 : index
      %13 = vector.load %arg7[%c0, %c0_5] : memref<8x1xf32, #tpu.memory_space<vmem>>, vector<8x1xf32>
      tpu.vector_store %arg7[%c0, %c0_5], %12 {strides = array<i32>} : memref<8x1xf32, #tpu.memory_space<vmem>>, vector<8x1xf32>,
      %cst_6 = arith.constant 0.000000e+00 : f32
      %14 = vector.broadcast %cst_6 : f32 to vector<8x1xf32>
      %c0_7 = arith.constant 0 : index
      %c0_8 = arith.constant 0 : index
      %15 = vector.load %arg8[%c0_7, %c0_8] : memref<8x1xf32, #tpu.memory_space<vmem>>, vector<8x1xf32>
      tpu.vector_store %arg8[%c0_7, %c0_8], %14 {strides = array<i32>} : memref<8x1xf32, #tpu.memory_space<vmem>>, vector<8x1xf32>,
      %cst_9 = arith.constant 0.000000e+00 : f32
      %16 = vector.broadcast %cst_9 : f32 to vector<8x128xf32>
      %c0_10 = arith.constant 0 : index
      %c0_11 = arith.constant 0 : index
      %17 = vector.load %arg9[%c0_10, %c0_11] : memref<8x128xf32, #tpu.memory_space<vmem>>, vector<8x128xf32>
      tpu.vector_store %arg9[%c0_10, %c0_11], %16 {strides = array<i32>} : memref<8x128xf32, #tpu.memory_space<vmem>>, vector<8x128xf32>,
    } else {
    }
    %3 = arith.cmpi slt, %arg2, %arg1 : i32
    %4 = arith.extui %3 : i1 to i32
    %c0_i32_1 = arith.constant 0 : i32
    %5 = arith.cmpi ne, %4, %c0_i32_1 : i32
    scf.if %5 {
      %c0 = arith.constant 0 : index
      %c0_5 = arith.constant 0 : index
      %c0_6 = arith.constant 0 : index
      %c0_7 = arith.constant 0 : index
      %12 = vector.load %arg3[%c0, %c0_5, %c0_6, %c0_7] : memref<1x1x8x128xbf16, #tpu.memory_space<vmem>>, vector<1x1x8x128xbf16>
      %13 = vector.shape_cast %12 : vector<1x1x8x128xbf16> to vector<8x128xbf16>
      %cst = arith.constant 3.535160e-01 : bf16
      %14 = vector.broadcast %cst : bf16 to vector<8x128xbf16>
      %15 = arith.mulf %13, %14 : vector<8x128xbf16>
      %c0_8 = arith.constant 0 : index
      %c0_9 = arith.constant 0 : index
      %c0_10 = arith.constant 0 : index
      %c0_11 = arith.constant 0 : index
      %16 = vector.load %arg4[%c0_8, %c0_9, %c0_10, %c0_11] : memref<1x1x8x128xbf16, #tpu.memory_space<vmem>>, vector<1x1x8x128xbf16>
      %17 = vector.shape_cast %16 : vector<1x1x8x128xbf16> to vector<8x128xbf16>
      %c0_12 = arith.constant 0 : index
      %c0_13 = arith.constant 0 : index
      %c0_14 = arith.constant 0 : index
      %c0_15 = arith.constant 0 : index
      %18 = vector.load %arg5[%c0_12, %c0_13, %c0_14, %c0_15] : memref<1x1x8x128xbf16, #tpu.memory_space<vmem>>, vector<1x1x8x128xbf16>
      %19 = vector.shape_cast %18 : vector<1x1x8x128xbf16> to vector<8x128xbf16>
      %cst_16 = arith.constant dense<0.000000e+00> : vector<8x8xf32>
      %20 = tpu.matmul %15, %17, %cst_16 {dimension_numbers = #tpu.dot_dimension_numbers<[1], [1], [0], [0], [0, 0, 1, 0], [], []>} : vector<8x128xbf16>, vector<8x128xbf16>, vector<8x8xf32> -> vector<8x8xf32>
      %c0_17 = arith.constant 0 : index
      %c0_18 = arith.constant 0 : index
      %21 = vector.load %arg7[%c0_17, %c0_18] : memref<8x1xf32, #tpu.memory_space<vmem>>, vector<8x1xf32>
      %cst_19 = arith.constant dense<0xFF800000> : vector<8xf32>
      %22 = vector.multi_reduction <maximumf>, %20, %cst_19 [1] : vector<8x8xf32> to vector<8xf32>
      %23 = vector.shape_cast %22 : vector<8xf32> to vector<8x1xf32>
      %24 = arith.maximumf %21, %23 : vector<8x1xf32>
      %25 = arith.subf %21, %24 : vector<8x1xf32>
      %26 = math.exp %25 : vector<8x1xf32>
      %27 = vector.broadcast %24 : vector<8x1xf32> to vector<8x8xf32>
      %28 = arith.subf %20, %27 : vector<8x8xf32>
      %29 = math.exp %28 : vector<8x8xf32>
      %c0_20 = arith.constant 0 : index
      %c0_21 = arith.constant 0 : index
      %30 = vector.load %arg8[%c0_20, %c0_21] : memref<8x1xf32, #tpu.memory_space<vmem>>, vector<8x1xf32>
      %31 = arith.mulf %26, %30 : vector<8x1xf32>
      %cst_22 = arith.constant dense<0.000000e+00> : vector<8xf32>
      %32 = vector.multi_reduction <add>, %29, %cst_22 [1] : vector<8x8xf32> to vector<8xf32>
      %33 = vector.shape_cast %32 : vector<8xf32> to vector<8x1xf32>
      %34 = arith.addf %31, %33 : vector<8x1xf32>
      %c0_23 = arith.constant 0 : index
      %c0_24 = arith.constant 0 : index
      %35 = vector.load %arg8[%c0_23, %c0_24] : memref<8x1xf32, #tpu.memory_space<vmem>>, vector<8x1xf32>
      tpu.vector_store %arg8[%c0_23, %c0_24], %34 {strides = array<i32>} : memref<8x1xf32, #tpu.memory_space<vmem>>, vector<8x1xf32>,
      %c0_25 = arith.constant 0 : index
      %c0_26 = arith.constant 0 : index
      %36 = vector.load %arg9[%c0_25, %c0_26] : memref<8x128xf32, #tpu.memory_space<vmem>>, vector<8x128xf32>
      %37 = vector.broadcast %26 : vector<8x1xf32> to vector<8x128xf32>
      %38 = arith.mulf %37, %36 : vector<8x128xf32>
      %39 = arith.truncf %29 : vector<8x8xf32> to vector<8x8xbf16>
      %cst_27 = arith.constant dense<0.000000e+00> : vector<8x128xf32>
      %40 = tpu.matmul %39, %19, %cst_27 {dimension_numbers = #tpu.dot_dimension_numbers<[1], [0], [0], [1], [0, 0, 1, 1], [], []>} : vector<8x8xbf16>, vector<8x128xbf16>, vector<8x128xf32> -> vector<8x128xf32>
      %41 = arith.addf %38, %40 : vector<8x128xf32>
      %c0_28 = arith.constant 0 : index
      %c0_29 = arith.constant 0 : index
      %42 = vector.load %arg9[%c0_28, %c0_29] : memref<8x128xf32, #tpu.memory_space<vmem>>, vector<8x128xf32>
      tpu.vector_store %arg9[%c0_28, %c0_29], %41 {strides = array<i32>} : memref<8x128xf32, #tpu.memory_space<vmem>>, vector<8x128xf32>,
      %c0_30 = arith.constant 0 : index
      %c0_31 = arith.constant 0 : index
      %43 = vector.load %arg7[%c0_30, %c0_31] : memref<8x1xf32, #tpu.memory_space<vmem>>, vector<8x1xf32>
      tpu.vector_store %arg7[%c0_30, %c0_31], %24 {strides = array<i32>} : memref<8x1xf32, #tpu.memory_space<vmem>>, vector<8x1xf32>,
    } else {
    }
    %6 = arith.cmpi eq, %arg2, %arg1 : i32
    %7 = arith.extui %6 : i1 to i32
    %c0_i32_2 = arith.constant 0 : i32
    %8 = arith.cmpi ne, %7, %c0_i32_2 : i32
    scf.if %8 {
      %c0 = arith.constant 0 : index
      %c0_5 = arith.constant 0 : index
      %c0_6 = arith.constant 0 : index
      %c0_7 = arith.constant 0 : index
      %12 = vector.load %arg3[%c0, %c0_5, %c0_6, %c0_7] : memref<1x1x8x128xbf16, #tpu.memory_space<vmem>>, vector<1x1x8x128xbf16>
      %13 = vector.shape_cast %12 : vector<1x1x8x128xbf16> to vector<8x128xbf16>
      %cst = arith.constant 3.535160e-01 : bf16
      %14 = vector.broadcast %cst : bf16 to vector<8x128xbf16>
      %15 = arith.mulf %13, %14 : vector<8x128xbf16>
      %c0_8 = arith.constant 0 : index
      %c0_9 = arith.constant 0 : index
      %c0_10 = arith.constant 0 : index
      %c0_11 = arith.constant 0 : index
      %16 = vector.load %arg4[%c0_8, %c0_9, %c0_10, %c0_11] : memref<1x1x8x128xbf16, #tpu.memory_space<vmem>>, vector<1x1x8x128xbf16>
      %17 = vector.shape_cast %16 : vector<1x1x8x128xbf16> to vector<8x128xbf16>
      %c0_12 = arith.constant 0 : index
      %c0_13 = arith.constant 0 : index
      %c0_14 = arith.constant 0 : index
      %c0_15 = arith.constant 0 : index
      %18 = vector.load %arg5[%c0_12, %c0_13, %c0_14, %c0_15] : memref<1x1x8x128xbf16, #tpu.memory_space<vmem>>, vector<1x1x8x128xbf16>
      %19 = vector.shape_cast %18 : vector<1x1x8x128xbf16> to vector<8x128xbf16>
      %cst_16 = arith.constant dense<0.000000e+00> : vector<8x8xf32>
      %20 = tpu.matmul %15, %17, %cst_16 {dimension_numbers = #tpu.dot_dimension_numbers<[1], [1], [0], [0], [0, 0, 1, 0], [], []>} : vector<8x128xbf16>, vector<8x128xbf16>, vector<8x8xf32> -> vector<8x8xf32>
      %c8_i32 = arith.constant 8 : i32
      %21 = arith.muli %arg1, %c8_i32 : i32
      %22 = tpu.iota {dimensions = array<i32: 0>} : vector<8x8xi32>
      %23 = vector.broadcast %21 : i32 to vector<8x8xi32>
      %24 = arith.addi %23, %22 : vector<8x8xi32>
      %c8_i32_17 = arith.constant 8 : i32
      %25 = arith.muli %arg2, %c8_i32_17 : i32
      %26 = tpu.iota {dimensions = array<i32: 1>} : vector<8x8xi32>
      %27 = vector.broadcast %25 : i32 to vector<8x8xi32>
      %28 = arith.addi %27, %26 : vector<8x8xi32>
      %29 = arith.cmpi sgt, %28, %24 : vector<8x8xi32>
      %c8_i32_18 = arith.constant 8 : i32
      %30 = vector.broadcast %c8_i32_18 : i32 to vector<8x8xi32>
      %31 = arith.cmpi sge, %28, %30 : vector<8x8xi32>
      %32 = arith.ori %29, %31 : vector<8x8xi1>
      %cst_19 = arith.constant -1.000000e+30 : f32
      %33 = vector.broadcast %cst_19 : f32 to vector<8x8xf32>
      %34 = arith.select %32, %33, %20 : vector<8x8xi1>, vector<8x8xf32>
      %c0_20 = arith.constant 0 : index
      %c0_21 = arith.constant 0 : index
      %35 = vector.load %arg7[%c0_20, %c0_21] : memref<8x1xf32, #tpu.memory_space<vmem>>, vector<8x1xf32>
      %cst_22 = arith.constant dense<0xFF800000> : vector<8xf32>
      %36 = vector.multi_reduction <maximumf>, %34, %cst_22 [1] : vector<8x8xf32> to vector<8xf32>
      %37 = vector.shape_cast %36 : vector<8xf32> to vector<8x1xf32>
      %38 = arith.maximumf %35, %37 : vector<8x1xf32>
      %39 = arith.subf %35, %38 : vector<8x1xf32>
      %40 = math.exp %39 : vector<8x1xf32>
      %41 = vector.broadcast %38 : vector<8x1xf32> to vector<8x8xf32>
      %42 = arith.subf %34, %41 : vector<8x8xf32>
      %43 = math.exp %42 : vector<8x8xf32>
      %c0_23 = arith.constant 0 : index
      %c0_24 = arith.constant 0 : index
      %44 = vector.load %arg8[%c0_23, %c0_24] : memref<8x1xf32, #tpu.memory_space<vmem>>, vector<8x1xf32>
      %45 = arith.mulf %40, %44 : vector<8x1xf32>
      %cst_25 = arith.constant dense<0.000000e+00> : vector<8xf32>
      %46 = vector.multi_reduction <add>, %43, %cst_25 [1] : vector<8x8xf32> to vector<8xf32>
      %47 = vector.shape_cast %46 : vector<8xf32> to vector<8x1xf32>
      %48 = arith.addf %45, %47 : vector<8x1xf32>
      %c0_26 = arith.constant 0 : index
      %c0_27 = arith.constant 0 : index
      %49 = vector.load %arg8[%c0_26, %c0_27] : memref<8x1xf32, #tpu.memory_space<vmem>>, vector<8x1xf32>
      tpu.vector_store %arg8[%c0_26, %c0_27], %48 {strides = array<i32>} : memref<8x1xf32, #tpu.memory_space<vmem>>, vector<8x1xf32>,
      %c0_28 = arith.constant 0 : index
      %c0_29 = arith.constant 0 : index
      %50 = vector.load %arg9[%c0_28, %c0_29] : memref<8x128xf32, #tpu.memory_space<vmem>>, vector<8x128xf32>
      %51 = vector.broadcast %40 : vector<8x1xf32> to vector<8x128xf32>
      %52 = arith.mulf %51, %50 : vector<8x128xf32>
      %53 = arith.truncf %43 : vector<8x8xf32> to vector<8x8xbf16>
      %cst_30 = arith.constant dense<0.000000e+00> : vector<8x128xf32>
      %54 = tpu.matmul %53, %19, %cst_30 {dimension_numbers = #tpu.dot_dimension_numbers<[1], [0], [0], [1], [0, 0, 1, 1], [], []>} : vector<8x8xbf16>, vector<8x128xbf16>, vector<8x128xf32> -> vector<8x128xf32>
      %55 = arith.addf %52, %54 : vector<8x128xf32>
      %c0_31 = arith.constant 0 : index
      %c0_32 = arith.constant 0 : index
      %56 = vector.load %arg9[%c0_31, %c0_32] : memref<8x128xf32, #tpu.memory_space<vmem>>, vector<8x128xf32>
      tpu.vector_store %arg9[%c0_31, %c0_32], %55 {strides = array<i32>} : memref<8x128xf32, #tpu.memory_space<vmem>>, vector<8x128xf32>,
      %c0_33 = arith.constant 0 : index
      %c0_34 = arith.constant 0 : index
      %57 = vector.load %arg7[%c0_33, %c0_34] : memref<8x1xf32, #tpu.memory_space<vmem>>, vector<8x1xf32>
      tpu.vector_store %arg7[%c0_33, %c0_34], %38 {strides = array<i32>} : memref<8x1xf32, #tpu.memory_space<vmem>>, vector<8x1xf32>,
    } else {
    }
    %c0_i32_3 = arith.constant 0 : i32
    %9 = arith.cmpi eq, %arg2, %c0_i32_3 : i32
    %10 = arith.extui %9 : i1 to i32
    %c0_i32_4 = arith.constant 0 : i32
    %11 = arith.cmpi ne, %10, %c0_i32_4 : i32
    scf.if %11 {
      %c0 = arith.constant 0 : index
      %c0_5 = arith.constant 0 : index
      %12 = vector.load %arg8[%c0, %c0_5] : memref<8x1xf32, #tpu.memory_space<vmem>>, vector<8x1xf32>
      %13 = tpu.reciprocal %12 {approx = true} : vector<8x1xf32> -> vector<8x1xf32>
      %c0_6 = arith.constant 0 : index
      %c0_7 = arith.constant 0 : index
      %14 = vector.load %arg9[%c0_6, %c0_7] : memref<8x128xf32, #tpu.memory_space<vmem>>, vector<8x128xf32>
      %15 = vector.broadcast %13 : vector<8x1xf32> to vector<8x128xf32>
      %16 = arith.mulf %14, %15 : vector<8x128xf32>
      %17 = arith.truncf %16 : vector<8x128xf32> to vector<8x128xbf16>
      %c0_8 = arith.constant 0 : index
      %c0_9 = arith.constant 0 : index
      %c0_10 = arith.constant 0 : index
      %18 = vector.load %arg6[%c0_8, %c0_9, %c0_10] : memref<1x8x128xbf16, #tpu.memory_space<vmem>>, vector<1x8x128xbf16>
      %19 = vector.shape_cast %18 : vector<1x8x128xbf16> to vector<8x128xbf16>
      %20 = vector.shape_cast %17 : vector<8x128xbf16> to vector<1x8x128xbf16>
      tpu.vector_store %arg6[%c0_8, %c0_9, %c0_10], %20 {strides = array<i32>} : memref<1x8x128xbf16, #tpu.memory_space<vmem>>, vector<1x8x128xbf16>,
    } else {
    }
    return
  }
  func.func @transform_0(%arg0: i32, %arg1: i32, %arg2: i32) -> (i32, i32, i32, i32) {
    %c0_i32 = arith.constant 0 : i32
    %c0_i32_0 = arith.constant 0 : i32
    %c0_i32_1 = arith.constant 0 : i32
    return %c0_i32, %arg0, %arg1, %c0_i32_0 : i32, i32, i32, i32
  }
  func.func @transform_1(%arg0: i32, %arg1: i32, %arg2: i32) -> (i32, i32, i32, i32) {
    %0 = arith.minsi %arg1, %arg2 : i32
    %c1_i32 = arith.constant 1 : i32
    %c0_i32 = arith.constant 0 : i32
    %c0_i32_0 = arith.constant 0 : i32
    return %c1_i32, %arg0, %0, %c0_i32 : i32, i32, i32, i32
  }
  func.func @transform_2(%arg0: i32, %arg1: i32, %arg2: i32) -> (i32, i32, i32, i32) {
    %0 = arith.minsi %arg1, %arg2 : i32
    %c2_i32 = arith.constant 2 : i32
    %c0_i32 = arith.constant 0 : i32
    %c0_i32_0 = arith.constant 0 : i32
    return %c2_i32, %arg0, %0, %c0_i32 : i32, i32, i32, i32
  }
  func.func @transform_3(%arg0: i32, %arg1: i32, %arg2: i32) -> (i32, i32, i32) {
    %c0_i32 = arith.constant 0 : i32
    %c0_i32_0 = arith.constant 0 : i32
    return %arg0, %arg1, %c0_i32 : i32, i32, i32
  }
}

module attributes {stable_mosaic.version = 11 : i64} {
  func.func @_linear_kernel(%arg0: i32, %arg1: i32, %arg2: i32, %arg3: memref<16x128xbf16, #tpu.memory_space<vmem>>, %arg4: memref<128x128xbf16, #tpu.memory_space<vmem>>, %arg5: memref<1x128xf32, #tpu.memory_space<vmem>>, %arg6: memref<16x128xbf16, #tpu.memory_space<vmem>>, %arg7: memref<16x128xbf16, #tpu.memory_space<vmem>>) attributes {dimension_semantics = [#tpu.dimension_semantics<parallel>, #tpu.dimension_semantics<parallel>, #tpu.dimension_semantics<arbitrary>], iteration_bounds = array<i64: 1, 1, 1>, scalar_prefetch = 0 : i64, scratch_operands = 0 : i64, tpu.core_type = #tpu.core_type<tc>, window_params = [{transform_indices = @transform_0, window_bounds = array<i64: 16, 128>}, {transform_indices = @transform_1, window_bounds = array<i64: 128, 128>}, {transform_indices = @transform_2, window_bounds = array<i64: 1, 128>}, {transform_indices = @transform_3, window_bounds = array<i64: 16, 128>}, {transform_indices = @transform_4, window_bounds = array<i64: 16, 128>}]} {
    %c0 = arith.constant 0 : index
    %c0_0 = arith.constant 0 : index
    %0 = vector.load %arg3[%c0, %c0_0] : memref<16x128xbf16, #tpu.memory_space<vmem>>, vector<16x128xbf16>
    %c0_1 = arith.constant 0 : index
    %c0_2 = arith.constant 0 : index
    %1 = vector.load %arg4[%c0_1, %c0_2] : memref<128x128xbf16, #tpu.memory_space<vmem>>, vector<128x128xbf16>
    %cst = arith.constant dense<0.000000e+00> : vector<16x128xf32>
    %2 = tpu.matmul %0, %1, %cst {dimension_numbers = #tpu.dot_dimension_numbers<[1], [0], [0], [1], [0, 0, 1, 1], [], []>} : vector<16x128xbf16>, vector<128x128xbf16>, vector<16x128xf32> -> vector<16x128xf32>
    %c0_3 = arith.constant 0 : index
    %c0_4 = arith.constant 0 : index
    %3 = vector.load %arg5[%c0_3, %c0_4] : memref<1x128xf32, #tpu.memory_space<vmem>>, vector<1x128xf32>
    %4 = vector.broadcast %3 : vector<1x128xf32> to vector<16x128xf32>
    %5 = arith.addf %2, %4 : vector<16x128xf32>
    %c0_5 = arith.constant 0 : index
    %c0_6 = arith.constant 0 : index
    %6 = vector.load %arg6[%c0_5, %c0_6] : memref<16x128xbf16, #tpu.memory_space<vmem>>, vector<16x128xbf16>
    %7 = arith.extf %6 : vector<16x128xbf16> to vector<16x128xf32>
    %8 = arith.addf %5, %7 : vector<16x128xf32>
    %9 = arith.truncf %8 : vector<16x128xf32> to vector<16x128xbf16>
    %c0_7 = arith.constant 0 : index
    %c0_8 = arith.constant 0 : index
    %10 = vector.load %arg7[%c0_7, %c0_8] : memref<16x128xbf16, #tpu.memory_space<vmem>>, vector<16x128xbf16>
    tpu.vector_store %arg7[%c0_7, %c0_8], %9 {strides = array<i32>} : memref<16x128xbf16, #tpu.memory_space<vmem>>, vector<16x128xbf16>,
    return
  }
  func.func @transform_0(%arg0: i32, %arg1: i32, %arg2: i32) -> (i32, i32) {
    %c0_i32 = arith.constant 0 : i32
    return %arg0, %arg2 : i32, i32
  }
  func.func @transform_1(%arg0: i32, %arg1: i32, %arg2: i32) -> (i32, i32) {
    %c0_i32 = arith.constant 0 : i32
    return %arg2, %arg1 : i32, i32
  }
  func.func @transform_2(%arg0: i32, %arg1: i32, %arg2: i32) -> (i32, i32) {
    %c0_i32 = arith.constant 0 : i32
    %c0_i32_0 = arith.constant 0 : i32
    return %c0_i32, %arg1 : i32, i32
  }
  func.func @transform_3(%arg0: i32, %arg1: i32, %arg2: i32) -> (i32, i32) {
    %c0_i32 = arith.constant 0 : i32
    return %arg0, %arg1 : i32, i32
  }
  func.func @transform_4(%arg0: i32, %arg1: i32, %arg2: i32) -> (i32, i32) {
    %c0_i32 = arith.constant 0 : i32
    return %arg0, %arg1 : i32, i32
  }
}

module attributes {stable_mosaic.version = 11 : i64} {
  func.func @_linear_kernel(%arg0: i32, %arg1: i32, %arg2: i32, %arg3: memref<16x128xbf16, #tpu.memory_space<vmem>>, %arg4: memref<128x128xbf16, #tpu.memory_space<vmem>>, %arg5: memref<1x128xf32, #tpu.memory_space<vmem>>, %arg6: memref<1x128xf32, #tpu.memory_space<vmem>>, %arg7: memref<1x128xf32, #tpu.memory_space<vmem>>, %arg8: memref<16x128xbf16, #tpu.memory_space<vmem>>, %arg9: memref<16x128xbf16, #tpu.memory_space<vmem>>) attributes {dimension_semantics = [#tpu.dimension_semantics<parallel>, #tpu.dimension_semantics<arbitrary>, #tpu.dimension_semantics<arbitrary>], iteration_bounds = array<i64: 1, 1, 1>, scalar_prefetch = 0 : i64, scratch_operands = 1 : i64, tpu.core_type = #tpu.core_type<tc>, window_params = [{transform_indices = @transform_0, window_bounds = array<i64: 16, 128>}, {transform_indices = @transform_1, window_bounds = array<i64: 128, 128>}, {transform_indices = @transform_2, window_bounds = array<i64: 1, 128>}, {pipeline_mode = #tpu.pipeline_mode<synchronous>, transform_indices = @transform_3, window_bounds = array<i64: 1, 128>}, {pipeline_mode = #tpu.pipeline_mode<synchronous>, transform_indices = @transform_4, window_bounds = array<i64: 1, 128>}, {transform_indices = @transform_5, window_bounds = array<i64: 16, 128>}]} {
    %c0_i32 = arith.constant 0 : i32
    %0 = arith.cmpi eq, %arg1, %c0_i32 : i32
    %1 = arith.extui %0 : i1 to i32
    %c0_i32_0 = arith.constant 0 : i32
    %2 = arith.cmpi ne, %1, %c0_i32_0 : i32
    scf.if %2 {
      %c0_9 = arith.constant 0 : index
      %c0_10 = arith.constant 0 : index
      %13 = vector.load %arg3[%c0_9, %c0_10] : memref<16x128xbf16, #tpu.memory_space<vmem>>, vector<16x128xbf16>
      %14 = arith.extf %13 : vector<16x128xbf16> to vector<16x128xf32>
      %cst_11 = arith.constant dense<0.000000e+00> : vector<16xf32>
      %15 = vector.multi_reduction <add>, %14, %cst_11 [1] : vector<16x128xf32> to vector<16xf32>
      %16 = vector.shape_cast %15 : vector<16xf32> to vector<16x1xf32>
      %cst_12 = arith.constant 3.125000e-02 : f32
      %17 = vector.broadcast %cst_12 : f32 to vector<16x1xf32>
      %18 = arith.mulf %16, %17 : vector<16x1xf32>
      %19 = arith.mulf %14, %14 : vector<16x128xf32>
      %cst_13 = arith.constant dense<0.000000e+00> : vector<16xf32>
      %20 = vector.multi_reduction <add>, %19, %cst_13 [1] : vector<16x128xf32> to vector<16xf32>
      %21 = vector.shape_cast %20 : vector<16xf32> to vector<16x1xf32>
      %cst_14 = arith.constant 3.125000e-02 : f32
      %22 = vector.broadcast %cst_14 : f32 to vector<16x1xf32>
      %23 = arith.mulf %21, %22 : vector<16x1xf32>
      %24 = arith.mulf %18, %18 : vector<16x1xf32>
      %25 = arith.subf %23, %24 : vector<16x1xf32>
      %26 = vector.broadcast %18 : vector<16x1xf32> to vector<16x128xf32>
      %27 = arith.subf %14, %26 : vector<16x128xf32>
      %cst_15 = arith.constant 9.99999974E-6 : f32
      %28 = vector.broadcast %cst_15 : f32 to vector<16x1xf32>
      %29 = arith.addf %25, %28 : vector<16x1xf32>
      %30 = math.rsqrt %29 : vector<16x1xf32>
      %31 = vector.broadcast %30 : vector<16x1xf32> to vector<16x128xf32>
      %32 = arith.mulf %27, %31 : vector<16x128xf32>
      %c0_16 = arith.constant 0 : index
      %c0_17 = arith.constant 0 : index
      %33 = vector.load %arg6[%c0_16, %c0_17] : memref<1x128xf32, #tpu.memory_space<vmem>>, vector<1x128xf32>
      %34 = vector.broadcast %33 : vector<1x128xf32> to vector<16x128xf32>
      %35 = arith.mulf %32, %34 : vector<16x128xf32>
      %c0_18 = arith.constant 0 : index
      %c0_19 = arith.constant 0 : index
      %36 = vector.load %arg7[%c0_18, %c0_19] : memref<1x128xf32, #tpu.memory_space<vmem>>, vector<1x128xf32>
      %37 = vector.broadcast %36 : vector<1x128xf32> to vector<16x128xf32>
      %38 = arith.addf %35, %37 : vector<16x128xf32>
      %39 = arith.truncf %38 : vector<16x128xf32> to vector<16x128xbf16>
      %c0_20 = arith.constant 0 : index
      %c0_21 = arith.constant 0 : index
      %40 = vector.load %arg9[%c0_20, %c0_21] : memref<16x128xbf16, #tpu.memory_space<vmem>>, vector<16x128xbf16>
      tpu.vector_store %arg9[%c0_20, %c0_21], %39 {strides = array<i32>} : memref<16x128xbf16, #tpu.memory_space<vmem>>, vector<16x128xbf16>,
    } else {
    }
    %c0 = arith.constant 0 : index
    %c0_1 = arith.constant 0 : index
    %3 = vector.load %arg9[%c0, %c0_1] : memref<16x128xbf16, #tpu.memory_space<vmem>>, vector<16x128xbf16>
    %c0_2 = arith.constant 0 : index
    %c0_3 = arith.constant 0 : index
    %4 = vector.load %arg4[%c0_2, %c0_3] : memref<128x128xbf16, #tpu.memory_space<vmem>>, vector<128x128xbf16>
    %cst = arith.constant dense<0.000000e+00> : vector<16x128xf32>
    %5 = tpu.matmul %3, %4, %cst {dimension_numbers = #tpu.dot_dimension_numbers<[1], [0], [0], [1], [0, 0, 1, 1], [], []>} : vector<16x128xbf16>, vector<128x128xbf16>, vector<16x128xf32> -> vector<16x128xf32>
    %c0_4 = arith.constant 0 : index
    %c0_5 = arith.constant 0 : index
    %6 = vector.load %arg5[%c0_4, %c0_5] : memref<1x128xf32, #tpu.memory_space<vmem>>, vector<1x128xf32>
    %7 = vector.broadcast %6 : vector<1x128xf32> to vector<16x128xf32>
    %8 = arith.addf %5, %7 : vector<16x128xf32>
    %cst_6 = arith.constant 0.000000e+00 : f32
    %9 = vector.broadcast %cst_6 : f32 to vector<16x128xf32>
    %10 = arith.maximumf %8, %9 : vector<16x128xf32>
    %11 = arith.truncf %10 : vector<16x128xf32> to vector<16x128xbf16>
    %c0_7 = arith.constant 0 : index
    %c0_8 = arith.constant 0 : index
    %12 = vector.load %arg8[%c0_7, %c0_8] : memref<16x128xbf16, #tpu.memory_space<vmem>>, vector<16x128xbf16>
    tpu.vector_store %arg8[%c0_7, %c0_8], %11 {strides = array<i32>} : memref<16x128xbf16, #tpu.memory_space<vmem>>, vector<16x128xbf16>,
    return
  }
  func.func @transform_0(%arg0: i32, %arg1: i32, %arg2: i32) -> (i32, i32) {
    %c0_i32 = arith.constant 0 : i32
    return %arg0, %arg2 : i32, i32
  }
  func.func @transform_1(%arg0: i32, %arg1: i32, %arg2: i32) -> (i32, i32) {
    %c0_i32 = arith.constant 0 : i32
    return %arg2, %arg1 : i32, i32
  }
  func.func @transform_2(%arg0: i32, %arg1: i32, %arg2: i32) -> (i32, i32) {
    %c0_i32 = arith.constant 0 : i32
    %c0_i32_0 = arith.constant 0 : i32
    return %c0_i32, %arg1 : i32, i32
  }
  func.func @transform_3(%arg0: i32, %arg1: i32, %arg2: i32) -> (i32, i32) {
    %c0_i32 = arith.constant 0 : i32
    %c0_i32_0 = arith.constant 0 : i32
    %c0_i32_1 = arith.constant 0 : i32
    return %c0_i32, %c0_i32_0 : i32, i32
  }
  func.func @transform_4(%arg0: i32, %arg1: i32, %arg2: i32) -> (i32, i32) {
    %c0_i32 = arith.constant 0 : i32
    %c0_i32_0 = arith.constant 0 : i32
    %c0_i32_1 = arith.constant 0 : i32
    return %c0_i32, %c0_i32_0 : i32, i32
  }
  func.func @transform_5(%arg0: i32, %arg1: i32, %arg2: i32) -> (i32, i32) {
    %c0_i32 = arith.constant 0 : i32
    return %arg0, %arg1 : i32, i32
  }
}

module attributes {stable_mosaic.version = 11 : i64} {
  func.func @_linear_kernel(%arg0: i32, %arg1: i32, %arg2: i32, %arg3: memref<16x128xbf16, #tpu.memory_space<vmem>>, %arg4: memref<128x128xbf16, #tpu.memory_space<vmem>>, %arg5: memref<1x128xf32, #tpu.memory_space<vmem>>, %arg6: memref<1x128xf32, #tpu.memory_space<vmem>>, %arg7: memref<1x128xf32, #tpu.memory_space<vmem>>, %arg8: memref<16x128xf32, #tpu.memory_space<vmem>>, %arg9: memref<16x128xbf16, #tpu.memory_space<vmem>>) attributes {dimension_semantics = [#tpu.dimension_semantics<parallel>, #tpu.dimension_semantics<arbitrary>, #tpu.dimension_semantics<arbitrary>], iteration_bounds = array<i64: 1, 1, 1>, scalar_prefetch = 0 : i64, scratch_operands = 1 : i64, tpu.core_type = #tpu.core_type<tc>, window_params = [{transform_indices = @transform_0, window_bounds = array<i64: 16, 128>}, {transform_indices = @transform_1, window_bounds = array<i64: 128, 128>}, {transform_indices = @transform_2, window_bounds = array<i64: 1, 128>}, {pipeline_mode = #tpu.pipeline_mode<synchronous>, transform_indices = @transform_3, window_bounds = array<i64: 1, 128>}, {pipeline_mode = #tpu.pipeline_mode<synchronous>, transform_indices = @transform_4, window_bounds = array<i64: 1, 128>}, {transform_indices = @transform_5, window_bounds = array<i64: 16, 128>}]} {
    %c0_i32 = arith.constant 0 : i32
    %0 = arith.cmpi eq, %arg1, %c0_i32 : i32
    %1 = arith.extui %0 : i1 to i32
    %c0_i32_0 = arith.constant 0 : i32
    %2 = arith.cmpi ne, %1, %c0_i32_0 : i32
    scf.if %2 {
      %c0_8 = arith.constant 0 : index
      %c0_9 = arith.constant 0 : index
      %10 = vector.load %arg3[%c0_8, %c0_9] : memref<16x128xbf16, #tpu.memory_space<vmem>>, vector<16x128xbf16>
      %11 = arith.extf %10 : vector<16x128xbf16> to vector<16x128xf32>
      %cst_10 = arith.constant dense<0.000000e+00> : vector<16xf32>
      %12 = vector.multi_reduction <add>, %11, %cst_10 [1] : vector<16x128xf32> to vector<16xf32>
      %13 = vector.shape_cast %12 : vector<16xf32> to vector<16x1xf32>
      %cst_11 = arith.constant 3.125000e-02 : f32
      %14 = vector.broadcast %cst_11 : f32 to vector<16x1xf32>
      %15 = arith.mulf %13, %14 : vector<16x1xf32>
      %16 = arith.mulf %11, %11 : vector<16x128xf32>
      %cst_12 = arith.constant dense<0.000000e+00> : vector<16xf32>
      %17 = vector.multi_reduction <add>, %16, %cst_12 [1] : vector<16x128xf32> to vector<16xf32>
      %18 = vector.shape_cast %17 : vector<16xf32> to vector<16x1xf32>
      %cst_13 = arith.constant 3.125000e-02 : f32
      %19 = vector.broadcast %cst_13 : f32 to vector<16x1xf32>
      %20 = arith.mulf %18, %19 : vector<16x1xf32>
      %21 = arith.mulf %15, %15 : vector<16x1xf32>
      %22 = arith.subf %20, %21 : vector<16x1xf32>
      %23 = vector.broadcast %15 : vector<16x1xf32> to vector<16x128xf32>
      %24 = arith.subf %11, %23 : vector<16x128xf32>
      %cst_14 = arith.constant 9.99999974E-6 : f32
      %25 = vector.broadcast %cst_14 : f32 to vector<16x1xf32>
      %26 = arith.addf %22, %25 : vector<16x1xf32>
      %27 = math.rsqrt %26 : vector<16x1xf32>
      %28 = vector.broadcast %27 : vector<16x1xf32> to vector<16x128xf32>
      %29 = arith.mulf %24, %28 : vector<16x128xf32>
      %c0_15 = arith.constant 0 : index
      %c0_16 = arith.constant 0 : index
      %30 = vector.load %arg6[%c0_15, %c0_16] : memref<1x128xf32, #tpu.memory_space<vmem>>, vector<1x128xf32>
      %31 = vector.broadcast %30 : vector<1x128xf32> to vector<16x128xf32>
      %32 = arith.mulf %29, %31 : vector<16x128xf32>
      %c0_17 = arith.constant 0 : index
      %c0_18 = arith.constant 0 : index
      %33 = vector.load %arg7[%c0_17, %c0_18] : memref<1x128xf32, #tpu.memory_space<vmem>>, vector<1x128xf32>
      %34 = vector.broadcast %33 : vector<1x128xf32> to vector<16x128xf32>
      %35 = arith.addf %32, %34 : vector<16x128xf32>
      %36 = arith.truncf %35 : vector<16x128xf32> to vector<16x128xbf16>
      %c0_19 = arith.constant 0 : index
      %c0_20 = arith.constant 0 : index
      %37 = vector.load %arg9[%c0_19, %c0_20] : memref<16x128xbf16, #tpu.memory_space<vmem>>, vector<16x128xbf16>
      tpu.vector_store %arg9[%c0_19, %c0_20], %36 {strides = array<i32>} : memref<16x128xbf16, #tpu.memory_space<vmem>>, vector<16x128xbf16>,
    } else {
    }
    %c0 = arith.constant 0 : index
    %c0_1 = arith.constant 0 : index
    %3 = vector.load %arg9[%c0, %c0_1] : memref<16x128xbf16, #tpu.memory_space<vmem>>, vector<16x128xbf16>
    %c0_2 = arith.constant 0 : index
    %c0_3 = arith.constant 0 : index
    %4 = vector.load %arg4[%c0_2, %c0_3] : memref<128x128xbf16, #tpu.memory_space<vmem>>, vector<128x128xbf16>
    %cst = arith.constant dense<0.000000e+00> : vector<16x128xf32>
    %5 = tpu.matmul %3, %4, %cst {dimension_numbers = #tpu.dot_dimension_numbers<[1], [0], [0], [1], [0, 0, 1, 1], [], []>} : vector<16x128xbf16>, vector<128x128xbf16>, vector<16x128xf32> -> vector<16x128xf32>
    %c0_4 = arith.constant 0 : index
    %c0_5 = arith.constant 0 : index
    %6 = vector.load %arg5[%c0_4, %c0_5] : memref<1x128xf32, #tpu.memory_space<vmem>>, vector<1x128xf32>
    %7 = vector.broadcast %6 : vector<1x128xf32> to vector<16x128xf32>
    %8 = arith.addf %5, %7 : vector<16x128xf32>
    %c0_6 = arith.constant 0 : index
    %c0_7 = arith.constant 0 : index
    %9 = vector.load %arg8[%c0_6, %c0_7] : memref<16x128xf32, #tpu.memory_space<vmem>>, vector<16x128xf32>
    tpu.vector_store %arg8[%c0_6, %c0_7], %8 {strides = array<i32>} : memref<16x128xf32, #tpu.memory_space<vmem>>, vector<16x128xf32>,
    return
  }
  func.func @transform_0(%arg0: i32, %arg1: i32, %arg2: i32) -> (i32, i32) {
    %c0_i32 = arith.constant 0 : i32
    return %arg0, %arg2 : i32, i32
  }
  func.func @transform_1(%arg0: i32, %arg1: i32, %arg2: i32) -> (i32, i32) {
    %c0_i32 = arith.constant 0 : i32
    return %arg2, %arg1 : i32, i32
  }
  func.func @transform_2(%arg0: i32, %arg1: i32, %arg2: i32) -> (i32, i32) {
    %c0_i32 = arith.constant 0 : i32
    %c0_i32_0 = arith.constant 0 : i32
    return %c0_i32, %arg1 : i32, i32
  }
  func.func @transform_3(%arg0: i32, %arg1: i32, %arg2: i32) -> (i32, i32) {
    %c0_i32 = arith.constant 0 : i32
    %c0_i32_0 = arith.constant 0 : i32
    %c0_i32_1 = arith.constant 0 : i32
    return %c0_i32, %c0_i32_0 : i32, i32
  }
  func.func @transform_4(%arg0: i32, %arg1: i32, %arg2: i32) -> (i32, i32) {
    %c0_i32 = arith.constant 0 : i32
    %c0_i32_0 = arith.constant 0 : i32
    %c0_i32_1 = arith.constant 0 : i32
    return %c0_i32, %c0_i32_0 : i32, i32
  }
  func.func @transform_5(%arg0: i32, %arg1: i32, %arg2: i32) -> (i32, i32) {
    %c0_i32 = arith.constant 0 : i32
    return %arg0, %arg1 : i32, i32
  }
}

</mosaic_0001>

<llo_original>
// kernel: jpt1_forward.12
$region0: #{jpt1_forward.12}
  #allocation0 [shape = 'u32[]', space=smem, size = 0x4, offset = 0x4, fixed_abs, tag = 'smem constant byte address 0x4 - core index']
  #allocation1 [shape = 'u32[144,128]{1,0:T(1,128)}', space=vmem, size = 0x12000, scoped, tag = 'internal scratch']
  #allocation2 [shape = 'bf16[16,16]{1,0:T(16,128)(2,1)}', space=vmem, size = 0x1000, scoped, tag = 'scratch operand']
  %s0 = inlined_call_operand.vmem [shape: bf16[16,8], index: 0, kind: input, shape index: {}]
  %s1 = inlined_call_operand.vmem [shape: bf16[8,16], index: 1, kind: input, shape index: {}]
  %s2 = inlined_call_operand.vmem [shape: f32[1,16], index: 2, kind: input, shape index: {}]
  %s3 = inlined_call_operand.vmem [shape: bf16[16,128], index: 3, kind: input, shape index: {}]
  %s4 = inlined_call_operand.vmem [shape: f32[1,128], index: 4, kind: input, shape index: {}]
  %s5 = inlined_call_operand.vmem [shape: bf16[16,128], index: 5, kind: input, shape index: {}]
  %s6 = inlined_call_operand.vmem [shape: bf16[16,128], index: 6, kind: output, shape index: {}]
  %s7 = sld [smem:[#allocation0]]
  $region38: #{jpt1_forward.12} parent=0
    _
  %s9 = ssub.s32 1, %s7
  %s10 = scalar_select 0, %s9, %s7
  // Predicated region
  $region2: #{jpt1_forward.12} parent=0 // pred_check
    _
  $region3: #{jpt1_forward.12} parent=0 // pred_check_branch
    %12 = sbr.rel (0) target = $region5
  $region4: #{jpt1_forward.12} parent=0 // pred_region
    _
  $region5: #{jpt1_forward.12} parent=0 // pred_fallthru
    _
  // Predicated region
  $region6: #{jpt1_forward.12} parent=0 // pred_check
    _
  $region7: #{jpt1_forward.12} parent=0 // pred_check_branch
    %14 = sbr.rel (0) target = $region9
  $region8: #{jpt1_forward.12} parent=0 // pred_region
    _
  $region9: #{jpt1_forward.12} parent=0 // pred_fallthru
    _
  // Predicated region
  $region10: #{jpt1_forward.12} parent=0 // pred_check
    _
  $region11: #{jpt1_forward.12} parent=0 // pred_check_branch
    %16 = sbr.rel (0) target = $region13
  $region12: #{jpt1_forward.12} parent=0 // pred_region
    _
  $region13: #{jpt1_forward.12} parent=0 // pred_fallthru
    _
  // Predicated region
  $region14: #{jpt1_forward.12} parent=0 // pred_check
    _
  $region15: #{jpt1_forward.12} parent=0 // pred_check_branch
    %18 = sbr.rel (0) target = $region17
  $region16: #{jpt1_forward.12} parent=0 // pred_region
    _
  $region17: #{jpt1_forward.12} parent=0 // pred_fallthru
    _
  // Predicated region
  $region18: #{jpt1_forward.12} parent=0 // pred_check
    _
  $region19: #{jpt1_forward.12} parent=0 // pred_check_branch
    %20 = sbr.rel (0) target = $region21
  $region20: #{jpt1_forward.12} parent=0 // pred_region
    _
  $region21: #{jpt1_forward.12} parent=0 // pred_fallthru
    _
  // Predicated region
  $region22: #{jpt1_forward.12} parent=0 // pred_check
    _
  $region23: #{jpt1_forward.12} parent=0 // pred_check_branch
    %22 = sbr.rel (0) target = $region25
  $region24: #{jpt1_forward.12} parent=0 // pred_region
    _
  $region25: #{jpt1_forward.12} parent=0 // pred_fallthru
    _
  %p24 = scmp.eq.s32.totalorder 0, 0
  // Predicated region
  $region26: #{jpt1_forward.12} parent=0 // pred_check
    %p25 = pneg %p24
  $region27: #{jpt1_forward.12} parent=0 // pred_check_branch
    %27 = sbr.rel (%p25) target = $region29
  $region28: #{jpt1_forward.12} parent=0 // pred_region
    %v28 = vld [vmem:[%s0] sm:$0xf]
    %v29 = vld [vmem:[%s0 + $0x4] sm:$0xf]
    %v30 = vld [vmem:[%s1] sm:$0xf]
    %v31 = vld [vmem:[%s2] sm:$0x1]
    %v33 = vlaneseq
    %v34 = vshrl.u32 %v33, 7
    %v35 = vsub.s32 0, %v34
    %v36 = vrot.slane %v31, %v35
    %v40 = vunpack.c.l.b16 %v28
    %v41 = vunpack.c.l.b16 %v29
    %v42 = vpack.c.b16 %v41, %v40
    %vm43 = vcmask 64512
    %v45 = vsel %vm43, %v42, 0
    %vm47 = vcmask 1043456
    %v49 = vsel %vm47, %v30, 0
    %51 = vmatprep.subr.bf16.mxu0 0
    %52 = vmatpush1.bf16.msra.mxu0 %v49
    %53 = vmatprep.subr.bf16.mxu0 0
    %54 = vmatpush1.bf16.msra.mxu0 0
    %55 = vmatprep.subr.bf16.mxu0 0
    %56 = vmatpush1.bf16.msra.mxu0 0
    %57 = vmatprep.subr.bf16.mxu0 0
    %58 = vmatpush1.bf16.msra.mxu0 0
    %59 = vmatprep.subr.bf16.mxu0 0
    %60 = vmatpush1.bf16.msra.mxu0 0
    %61 = vmatprep.subr.bf16.mxu0 0
    %62 = vmatpush1.bf16.msra.mxu0 0
    %63 = vmatprep.subr.bf16.mxu0 0
    %64 = vmatpush1.bf16.msra.mxu0 0
    %65 = vmatprep.subr.bf16.mxu0 0
    %66 = vmatpush1.bf16.msra.mxu0 0
    %67 = vmatprep.subr.bf16.mxu0 0
    %68 = vmatpush1.bf16.msra.mxu0 0
    %69 = vmatprep.subr.bf16.mxu0 0
    %70 = vmatpush1.bf16.msra.mxu0 0
    %71 = vmatprep.subr.bf16.mxu0 0
    %72 = vmatpush1.bf16.msra.mxu0 0
    %73 = vmatprep.subr.bf16.mxu0 0
    %74 = vmatpush1.bf16.msra.mxu0 0
    %75 = vmatprep.subr.bf16.mxu0 0
    %76 = vmatpush1.bf16.msra.mxu0 0
    %77 = vmatprep.subr.bf16.mxu0 0
    %78 = vmatpush1.bf16.msra.mxu0 0
    %79 = vmatprep.subr.bf16.mxu0 0
    %80 = vmatpush1.bf16.msra.mxu0 0
    %81 = vmatprep.subr.bf16.mxu0 0
    %82 = vmatpush1.bf16.msra.mxu0 0
    %83 = vmatprep.mubr.bf16.mxu0 0
    %84 = vmatmul.mubr.bf16.gmra.mrb[0].mxu0 %v45
    %v85 = vpop.f32.mrb[0].mxu0
    %v86 = vadd.f32 %v36, %v85
    %v87 = vpop.f32.mrb[0].mxu0
    %v88 = vpop.f32.mrb[0].mxu0
    %v89 = vadd.f32 %v36, %v88
    %v90 = vpop.f32.mrb[0].mxu0
    %91 = vdwg.mxu0
    %v92 = vpack.c.bf16 %v89, %v86
    %vm93 = vcmask 130048
    %94 = vst.msk [vmem:[#allocation2] sm:$0xff] %vm93, %v92
  $region29: #{jpt1_forward.12} parent=0 // pred_fallthru
    _
  %v95 = vld [vmem:[#allocation2] sm:$0xff]
  %v96 = vld [vmem:[%s3] sm:$0xf]
  %v97 = vld [vmem:[%s3 + $0x4] sm:$0xf]
  %v98 = vld [vmem:[%s4] sm:$0x1]
  %v100 = vlaneseq
  %v101 = vshrl.u32 %v100, 7
  %v102 = vsub.s32 0, %v101
  %v103 = vrot.slane %v98, %v102
  %v107 = vunpack.c.l.b16 %v96
  %v108 = vunpack.c.l.b16 %v97
  %v109 = vpack.c.b16 %v108, %v107
  %vm111 = vcmask 130048
  %v113 = vsel %vm111, %v95, 0
  %115 = vmatprep.subr.bf16.mxu0 0
  %116 = vmatpush1.bf16.msra.mxu0 %v109
  %117 = vmatprep.subr.bf16.mxu0 0
  %118 = vmatpush1.bf16.msra.mxu0 0
  %119 = vmatprep.subr.bf16.mxu0 0
  %120 = vmatpush1.bf16.msra.mxu0 0
  %121 = vmatprep.subr.bf16.mxu0 0
  %122 = vmatpush1.bf16.msra.mxu0 0
  %123 = vmatprep.subr.bf16.mxu0 0
  %124 = vmatpush1.bf16.msra.mxu0 0
  %125 = vmatprep.subr.bf16.mxu0 0
  %126 = vmatpush1.bf16.msra.mxu0 0
  %127 = vmatprep.subr.bf16.mxu0 0
  %128 = vmatpush1.bf16.msra.mxu0 0
  %129 = vmatprep.subr.bf16.mxu0 0
  %130 = vmatpush1.bf16.msra.mxu0 0
  %131 = vmatprep.subr.bf16.mxu0 0
  %132 = vmatpush1.bf16.msra.mxu0 0
  %133 = vmatprep.subr.bf16.mxu0 0
  %134 = vmatpush1.bf16.msra.mxu0 0
  %135 = vmatprep.subr.bf16.mxu0 0
  %136 = vmatpush1.bf16.msra.mxu0 0
  %137 = vmatprep.subr.bf16.mxu0 0
  %138 = vmatpush1.bf16.msra.mxu0 0
  %139 = vmatprep.subr.bf16.mxu0 0
  %140 = vmatpush1.bf16.msra.mxu0 0
  %141 = vmatprep.subr.bf16.mxu0 0
  %142 = vmatpush1.bf16.msra.mxu0 0
  %143 = vmatprep.subr.bf16.mxu0 0
  %144 = vmatpush1.bf16.msra.mxu0 0
  %145 = vmatprep.subr.bf16.mxu0 0
  %146 = vmatpush1.bf16.msra.mxu0 0
  %147 = vmatprep.mubr.bf16.mxu0 0
  %148 = vmatmul.mubr.bf16.gmra.mrb[0].mxu0 %v113
  %v149 = vpop.f32.mrb[0].mxu0
  %v150 = vadd.f32 %v103, %v149
  %v151 = vpop.f32.mrb[0].mxu0
  %v152 = vpop.f32.mrb[0].mxu0
  %v153 = vadd.f32 %v103, %v152
  %v154 = vpop.f32.mrb[0].mxu0
  %155 = vdwg.mxu0
  %v156 = vld [vmem:[%s5] sm:$0xf]
  %v157 = vld [vmem:[%s5 + $0x4] sm:$0xf]
  %v158 = vunpack.c.l.bf16 %v156
  %v159 = vunpack.c.l.bf16 %v157
  %v160 = vadd.f32 %v150, %v158
  %v161 = vadd.f32 %v153, %v159
  %v162 = vpack.c.bf16 %v161, %v160
  %v164 = vunpack.c.l.b16 %v162
  %v165 = vunpack.c.h.b16 %v162
  %v166 = vpack.c.b16 %v164, %v164
  %v167 = vpack.c.b16 %v165, %v165
  %170 = vst [vmem:[%s6] sm:$0xf] %v166
  %171 = vst [vmem:[%s6 + $0x4] sm:$0xf] %v167
  // Predicated region
  $region30: #{jpt1_forward.12} parent=0 // pred_check
    _
  $region31: #{jpt1_forward.12} parent=0 // pred_check_branch
    %173 = sbr.rel (0) target = $region33
  $region32: #{jpt1_forward.12} parent=0 // pred_region
    _
  $region33: #{jpt1_forward.12} parent=0 // pred_fallthru
    _
  // Predicated region
  $region34: #{jpt1_forward.12} parent=0 // pred_check
    _
  $region35: #{jpt1_forward.12} parent=0 // pred_check_branch
    %175 = sbr.rel (0) target = $region37
  $region36: #{jpt1_forward.12} parent=0 // pred_region
    _
  $region37: #{jpt1_forward.12} parent=0 // pred_fallthru
    _

// kernel: jpt1_forward.13
$region0: #{jpt1_forward.13}
  #allocation0 [shape = 'u32[]', space=smem, size = 0x4, offset = 0x4, fixed_abs, tag = 'smem constant byte address 0x4 - core index']
  #allocation1 [shape = 'u32[144,128]{1,0:T(1,128)}', space=vmem, size = 0x12000, scoped, tag = 'internal scratch']
  #allocation2 [shape = 'bf16[16,128]{1,0:T(16,128)(2,1)}', space=vmem, size = 0x1000, scoped, tag = 'scratch operand']
  %s0 = inlined_call_operand.vmem [shape: bf16[16,128], index: 0, kind: input, shape index: {}]
  %s1 = inlined_call_operand.vmem [shape: bf16[128,128], index: 1, kind: input, shape index: {}]
  %s2 = inlined_call_operand.vmem [shape: f32[1,128], index: 2, kind: input, shape index: {}]
  %s3 = inlined_call_operand.vmem [shape: f32[1,128], index: 3, kind: input, shape index: {}]
  %s4 = inlined_call_operand.vmem [shape: f32[1,128], index: 4, kind: input, shape index: {}]
  %s5 = inlined_call_operand.vmem [shape: bf16[16,128], index: 5, kind: output, shape index: {}]
  %s6 = sld [smem:[#allocation0]]
  $region34: #{jpt1_forward.13} parent=0
    _
  %s8 = ssub.s32 1, %s6
  %s9 = scalar_select 0, %s8, %s6
  // Predicated region
  $region2: #{jpt1_forward.13} parent=0 // pred_check
    _
  $region3: #{jpt1_forward.13} parent=0 // pred_check_branch
    %11 = sbr.rel (0) target = $region5
  $region4: #{jpt1_forward.13} parent=0 // pred_region
    _
  $region5: #{jpt1_forward.13} parent=0 // pred_fallthru
    _
  // Predicated region
  $region6: #{jpt1_forward.13} parent=0 // pred_check
    _
  $region7: #{jpt1_forward.13} parent=0 // pred_check_branch
    %13 = sbr.rel (0) target = $region9
  $region8: #{jpt1_forward.13} parent=0 // pred_region
    _
  $region9: #{jpt1_forward.13} parent=0 // pred_fallthru
    _
  // Predicated region
  $region10: #{jpt1_forward.13} parent=0 // pred_check
    _
  $region11: #{jpt1_forward.13} parent=0 // pred_check_branch
    %15 = sbr.rel (0) target = $region13
  $region12: #{jpt1_forward.13} parent=0 // pred_region
    _
  $region13: #{jpt1_forward.13} parent=0 // pred_fallthru
    _
  // Predicated region
  $region14: #{jpt1_forward.13} parent=0 // pred_check
    _
  $region15: #{jpt1_forward.13} parent=0 // pred_check_branch
    %17 = sbr.rel (0) target = $region17
  $region16: #{jpt1_forward.13} parent=0 // pred_region
    _
  $region17: #{jpt1_forward.13} parent=0 // pred_fallthru
    _
  // Predicated region
  $region18: #{jpt1_forward.13} parent=0 // pred_check
    _
  $region19: #{jpt1_forward.13} parent=0 // pred_check_branch
    %19 = sbr.rel (0) target = $region21
  $region20: #{jpt1_forward.13} parent=0 // pred_region
    _
  $region21: #{jpt1_forward.13} parent=0 // pred_fallthru
    _
  %p21 = scmp.eq.s32.totalorder 0, 0
  // Predicated region
  $region22: #{jpt1_forward.13} parent=0 // pred_check
    %p22 = pneg %p21
  $region23: #{jpt1_forward.13} parent=0 // pred_check_branch
    %24 = sbr.rel (%p22) target = $region25
  $region24: #{jpt1_forward.13} parent=0 // pred_region
    %v25 = vld [vmem:[%s0] sm:$0xf]
    %v26 = vld [vmem:[%s0 + $0x4] sm:$0xf]
    %v27 = vunpack.c.l.bf16 %v25
    %v28 = vunpack.c.l.bf16 %v26
    %29 = vadd.xlane.f32.xlu0 %v27
    %v30 = vpop.xlane.xlu0 %29
    %31 = vadd.xlane.f32.xlu0 %v28
    %v32 = vpop.xlane.xlu0 %31
    %v33 = vmul.f32 %v30, 0.03125
    %v34 = vmul.f32 %v32, 0.03125
    %v35 = vmul.f32 %v27, %v27
    %v36 = vmul.f32 %v28, %v28
    %37 = vadd.xlane.f32.xlu0 %v35
    %v38 = vpop.xlane.xlu0 %37
    %39 = vadd.xlane.f32.xlu0 %v36
    %v40 = vpop.xlane.xlu0 %39
    %v41 = vmul.f32 %v38, 0.03125
    %v42 = vmul.f32 %v40, 0.03125
    %v43 = vmul.f32 %v33, %v33
    %v44 = vmul.f32 %v34, %v34
    %v45 = vsub.f32 %v41, %v43
    %v46 = vsub.f32 %v42, %v44
    %v47 = vsub.f32 %v27, %v33
    %v48 = vsub.f32 %v28, %v34
    %v49 = vadd.f32 %v45, 1e-05
    %v50 = vadd.f32 %v46, 1e-05
    %v51 = vrsqrt.pop %v49
    %v52 = vrsqrt.pop %v50
    %v53 = vmul.f32 %v47, %v51
    %v54 = vmul.f32 %v48, %v52
    %v55 = vld [vmem:[%s3] sm:$0x1]
    %v57 = vlaneseq
    %v58 = vshrl.u32 %v57, 7
    %v59 = vsub.s32 0, %v58
    %v60 = vrot.slane %v55, %v59
    %v62 = vmul.f32 %v53, %v60
    %v63 = vmul.f32 %v54, %v60
    %v64 = vld [vmem:[%s4] sm:$0x1]
    %v66 = vlaneseq
    %v67 = vshrl.u32 %v66, 7
    %v68 = vsub.s32 0, %v67
    %v69 = vrot.slane %v64, %v68
    %v71 = vadd.f32 %v62, %v69
    %v72 = vadd.f32 %v63, %v69
    %v73 = vpack.c.bf16 %v72, %v71
    %74 = vst [vmem:[#allocation2] sm:$0xff] %v73
  $region25: #{jpt1_forward.13} parent=0 // pred_fallthru
    _
  %v75 = vld [vmem:[#allocation2] sm:$0xff]
  %v76 = vld [vmem:[%s1] sm:$0xf]
  %v77 = vld [vmem:[%s1 + $0x4] sm:$0xf]
  %v78 = vld [vmem:[%s1 + $0x8] sm:$0xf]
  %v79 = vld [vmem:[%s1 + $0xc] sm:$0xf]
  %v80 = vld [vmem:[%s1 + $0x10] sm:$0xf]
  %v81 = vld [vmem:[%s1 + $0x14] sm:$0xf]
  %v82 = vld [vmem:[%s1 + $0x18] sm:$0xf]
  %v83 = vld [vmem:[%s1 + $0x1c] sm:$0xf]
  %v84 = vld [vmem:[%s1 + $0x20] sm:$0xf]
  %v85 = vld [vmem:[%s1 + $0x24] sm:$0xf]
  %v86 = vld [vmem:[%s1 + $0x28] sm:$0xf]
  %v87 = vld [vmem:[%s1 + $0x2c] sm:$0xf]
  %v88 = vld [vmem:[%s1 + $0x30] sm:$0xf]
  %v89 = vld [vmem:[%s1 + $0x34] sm:$0xf]
  %v90 = vld [vmem:[%s1 + $0x38] sm:$0xf]
  %v91 = vld [vmem:[%s1 + $0x3c] sm:$0xf]
  %v92 = vld [vmem:[%s2] sm:$0x1]
  %v94 = vlaneseq
  %v95 = vshrl.u32 %v94, 7
  %v96 = vsub.s32 0, %v95
  %v97 = vrot.slane %v92, %v96
  %v115 = vunpack.c.l.b16 %v76
  %v116 = vunpack.c.l.b16 %v77
  %v117 = vunpack.c.l.b16 %v78
  %v118 = vunpack.c.l.b16 %v79
  %v119 = vunpack.c.l.b16 %v80
  %v120 = vunpack.c.l.b16 %v81
  %v121 = vunpack.c.l.b16 %v82
  %v122 = vunpack.c.l.b16 %v83
  %v123 = vunpack.c.l.b16 %v84
  %v124 = vunpack.c.l.b16 %v85
  %v125 = vunpack.c.l.b16 %v86
  %v126 = vunpack.c.l.b16 %v87
  %v127 = vunpack.c.l.b16 %v88
  %v128 = vunpack.c.l.b16 %v89
  %v129 = vunpack.c.l.b16 %v90
  %v130 = vunpack.c.l.b16 %v91
  %v131 = vpack.c.b16 %v116, %v115
  %v132 = vpack.c.b16 %v118, %v117
  %v133 = vpack.c.b16 %v120, %v119
  %v134 = vpack.c.b16 %v122, %v121
  %v135 = vpack.c.b16 %v124, %v123
  %v136 = vpack.c.b16 %v126, %v125
  %v137 = vpack.c.b16 %v128, %v127
  %v138 = vpack.c.b16 %v130, %v129
  %147 = vmatprep.subr.bf16.mxu0 0
  %148 = vmatpush1.bf16.msra.mxu0 %v131
  %149 = vmatprep.subr.bf16.mxu0 0
  %150 = vmatpush1.bf16.msra.mxu0 %v132
  %151 = vmatprep.subr.bf16.mxu0 0
  %152 = vmatpush1.bf16.msra.mxu0 %v133
  %153 = vmatprep.subr.bf16.mxu0 0
  %154 = vmatpush1.bf16.msra.mxu0 %v134
  %155 = vmatprep.subr.bf16.mxu0 0
  %156 = vmatpush1.bf16.msra.mxu0 %v135
  %157 = vmatprep.subr.bf16.mxu0 0
  %158 = vmatpush1.bf16.msra.mxu0 %v136
  %159 = vmatprep.subr.bf16.mxu0 0
  %160 = vmatpush1.bf16.msra.mxu0 %v137
  %161 = vmatprep.subr.bf16.mxu0 0
  %162 = vmatpush1.bf16.msra.mxu0 %v138
  %163 = vmatprep.subr.bf16.mxu0 0
  %164 = vmatpush1.bf16.msra.mxu0 0
  %165 = vmatprep.subr.bf16.mxu0 0
  %166 = vmatpush1.bf16.msra.mxu0 0
  %167 = vmatprep.subr.bf16.mxu0 0
  %168 = vmatpush1.bf16.msra.mxu0 0
  %169 = vmatprep.subr.bf16.mxu0 0
  %170 = vmatpush1.bf16.msra.mxu0 0
  %171 = vmatprep.subr.bf16.mxu0 0
  %172 = vmatpush1.bf16.msra.mxu0 0
  %173 = vmatprep.subr.bf16.mxu0 0
  %174 = vmatpush1.bf16.msra.mxu0 0
  %175 = vmatprep.subr.bf16.mxu0 0
  %176 = vmatpush1.bf16.msra.mxu0 0
  %177 = vmatprep.subr.bf16.mxu0 0
  %178 = vmatpush1.bf16.msra.mxu0 0
  %179 = vmatprep.mubr.bf16.mxu0 0
  %180 = vmatmul.mubr.bf16.gmra.mrb[0].mxu0 %v75
  %v181 = vpop.f32.mrb[0].mxu0
  %v182 = vadd.f32 %v97, %v181
  %v183 = vpop.f32.mrb[0].mxu0
  %v184 = vpop.f32.mrb[0].mxu0
  %v185 = vadd.f32 %v97, %v184
  %v186 = vpop.f32.mrb[0].mxu0
  %187 = vdwg.mxu0
  %v188 = vpack.c.bf16 %v185, %v182
  %v190 = vunpack.c.l.b16 %v188
  %v191 = vunpack.c.h.b16 %v188
  %v192 = vpack.c.b16 %v190, %v190
  %v193 = vpack.c.b16 %v191, %v191
  %196 = vst [vmem:[%s5] sm:$0xf] %v192
  %197 = vst [vmem:[%s5 + $0x4] sm:$0xf] %v193
  // Predicated region
  $region26: #{jpt1_forward.13} parent=0 // pred_check
    _
  $region27: #{jpt1_forward.13} parent=0 // pred_check_branch
    %199 = sbr.rel (0) target = $region29
  $region28: #{jpt1_forward.13} parent=0 // pred_region
    _
  $region29: #{jpt1_forward.13} parent=0 // pred_fallthru
    _
  // Predicated region
  $region30: #{jpt1_forward.13} parent=0 // pred_check
    _
  $region31: #{jpt1_forward.13} parent=0 // pred_check_branch
    %201 = sbr.rel (0) target = $region33
  $region32: #{jpt1_forward.13} parent=0 // pred_region
    _
  $region33: #{jpt1_forward.13} parent=0 // pred_fallthru
    _

// kernel: jpt1_forward.14
$region0: #{jpt1_forward.14}
  #allocation0 [shape = 'u32[]', space=smem, size = 0x4, offset = 0x4, fixed_abs, tag = 'smem constant byte address 0x4 - core index']
  #allocation1 [shape = 'u32[144,128]{1,0:T(1,128)}', space=vmem, size = 0x12000, scoped, tag = 'internal scratch']
  #allocation2 [shape = 'f32[8,1]{1,0:T(8,128)}', space=vmem, size = 0x1000, scoped, tag = 'scratch operand']
  #allocation3 [shape = 'f32[8,1]{1,0:T(8,128)}', space=vmem, size = 0x1000, scoped, tag = 'scratch operand']
  #allocation4 [shape = 'f32[8,128]{1,0:T(8,128)}', space=vmem, size = 0x1000, scoped, tag = 'scratch operand']
  %s0 = inlined_call_operand.vmem [shape: bf16[3,8,8,128], index: 0, kind: input, shape index: {}, may-alias: {0,1,2}]
  %s1 = inlined_call_operand.vmem [shape: bf16[3,8,8,128], index: 1, kind: input, shape index: {}, may-alias: {0,1,2}]
  %s2 = inlined_call_operand.vmem [shape: bf16[3,8,8,128], index: 2, kind: input, shape index: {}, may-alias: {0,1,2}]
  %s3 = inlined_call_operand.vmem [shape: bf16[8,8,128], index: 3, kind: output, shape index: {}]
  %s4 = sld [smem:[#allocation0]]
  $region61: #{jpt1_forward.14} parent=0
    _
  %s6 = ssub.s32 1, %s4
  %s7 = scalar_select 0, %s6, %s4
  loop: start=0, step=1, limit=10
  $region2: #{jpt1_forward.14} parent=0 // loop_pre_header
    _
  $region3: #{jpt1_forward.14} parent=0 // loop_header
    %s9 = sphi 0, %s13
    %p10 = scmp.ge.s32.totalorder %s9, 10
    %s16 = sphi 0, %s35
    %s17 = sphi 0, %s31
    %s18 = sphi 0, %s27
    %s19 = sphi 0, %s16
    %s20 = sphi 0, %s17
    %s21 = sphi 0, %s18
    %s22 = sphi 0, %s19
    %s23 = sphi 0, %s20
    %s24 = sphi 0, %s21
    %s40 = sphi 0, %s42
    %s43 = sphi 0, %s40
    %s44 = sphi 0, %s43
    %s60 = sphi 0, %s44
    %s72 = sphi 0, %s74
    %s75 = sphi 0, %s72
    %s76 = sphi 0, %s75
    %s92 = sphi 0, %s76
    %s104 = sphi 0, %s106
    %s107 = sphi 0, %s104
    %s108 = sphi 0, %s107
    %s124 = sphi 0, %s108
    %s132 = sphi 0, %s134
    %s135 = sphi 0, %s132
    %s136 = sphi 0, %s135
    %s152 = sphi 0, %s136
  $region4: #{jpt1_forward.14} parent=0 // loop_header_branch
    %12 = sbr.rel (%p10) target = $region8
  $region5: #{jpt1_forward.14} parent=0 // loop_body
    %s14 = ssub.s32 %s9, 1
    %s15 = ssub.s32 %s9, 2
    %s25 = sadd.s32 1, %s18
    %p26 = scmp.ge.s32.totalorder %s25, 1
    %s27 = scalar_select %p26, 0, %s25
    %s28 = sadd.s32 1, %s17
    %s29 = scalar_select %p26, %s28, %s17
    %p30 = scmp.ge.s32.totalorder %s29, 1
    %s31 = scalar_select %p30, 0, %s29
    %s32 = sadd.s32 1, %s16
    %s33 = scalar_select %p30, %s32, %s16
    %p34 = scmp.ge.s32.totalorder %s33, 8
    %s35 = scalar_select %p34, 0, %s33
    %s36 = ssub.s32 %s16, %s35
    %s37 = ssub.s32 %s17, %s31
    %s38 = sor.u32 %s36, %s37
    %p39 = scmp.eq.s32.totalorder %s38, 0
    %s41 = sadd.s32 %s40, 1
    %s42 = scalar_select %p39, %s40, %s41
    %p45 = pneg %p39
    %p46 = scmp.eq.s32.totalorder %s9, 7
    %p47 = por %p45, %p46
    %p48 = scmp.ne.s32.totalorder %s40, %s43
    %p49 = scmp.eq.s32.totalorder %s9, 0
    %p50 = por %p48, %p49
    %p51 = scmp.ne.s32.totalorder %s40, %s43
    %p52 = scmp.eq.s32.totalorder %s14, 7
    %p53 = por %p51, %p52
    %p54 = scmp.ne.s32.totalorder %s43, %s44
    %p55 = scmp.eq.s32.totalorder %s14, 0
    %p56 = por %p54, %p55
    %p57 = scmp.ne.s32.totalorder %s43, %s44
    %p58 = scmp.eq.s32.totalorder %s15, 7
    %p59 = por %p57, %p58
    %p61 = scmp.ne.s32.totalorder %s44, %s60
    %p62 = scmp.eq.s32.totalorder %s15, 0
    %p63 = por %p61, %p62
    %p64 = scmp.lt.s32.totalorder %s17, %s18
    %s65 = scalar_select %p64, %s17, %s18
    %p66 = scmp.lt.s32.totalorder %s31, %s27
    %s67 = scalar_select %p66, %s31, %s27
    %s68 = ssub.s32 %s16, %s35
    %s69 = ssub.s32 %s65, %s67
    %s70 = sor.u32 %s68, %s69
    %p71 = scmp.eq.s32.totalorder %s70, 0
    %s73 = sadd.s32 %s72, 1
    %s74 = scalar_select %p71, %s72, %s73
    %p77 = pneg %p71
    %p78 = scmp.eq.s32.totalorder %s9, 7
    %p79 = por %p77, %p78
    %p80 = scmp.ne.s32.totalorder %s72, %s75
    %p81 = scmp.eq.s32.totalorder %s9, 0
    %p82 = por %p80, %p81
    %p83 = scmp.ne.s32.totalorder %s72, %s75
    %p84 = scmp.eq.s32.totalorder %s14, 7
    %p85 = por %p83, %p84
    %p86 = scmp.ne.s32.totalorder %s75, %s76
    %p87 = scmp.eq.s32.totalorder %s14, 0
    %p88 = por %p86, %p87
    %p89 = scmp.ne.s32.totalorder %s75, %s76
    %p90 = scmp.eq.s32.totalorder %s15, 7
    %p91 = por %p89, %p90
    %p93 = scmp.ne.s32.totalorder %s76, %s92
    %p94 = scmp.eq.s32.totalorder %s15, 0
    %p95 = por %p93, %p94
    %p96 = scmp.lt.s32.totalorder %s17, %s18
    %s97 = scalar_select %p96, %s17, %s18
    %p98 = scmp.lt.s32.totalorder %s31, %s27
    %s99 = scalar_select %p98, %s31, %s27
    %s100 = ssub.s32 %s16, %s35
    %s101 = ssub.s32 %s97, %s99
    %s102 = sor.u32 %s100, %s101
    %p103 = scmp.eq.s32.totalorder %s102, 0
    %s105 = sadd.s32 %s104, 1
    %s106 = scalar_select %p103, %s104, %s105
    %p109 = pneg %p103
    %p110 = scmp.eq.s32.totalorder %s9, 7
    %p111 = por %p109, %p110
    %p112 = scmp.ne.s32.totalorder %s104, %s107
    %p113 = scmp.eq.s32.totalorder %s9, 0
    %p114 = por %p112, %p113
    %p115 = scmp.ne.s32.totalorder %s104, %s107
    %p116 = scmp.eq.s32.totalorder %s14, 7
    %p117 = por %p115, %p116
    %p118 = scmp.ne.s32.totalorder %s107, %s108
    %p119 = scmp.eq.s32.totalorder %s14, 0
    %p120 = por %p118, %p119
    %p121 = scmp.ne.s32.totalorder %s107, %s108
    %p122 = scmp.eq.s32.totalorder %s15, 7
    %p123 = por %p121, %p122
    %p125 = scmp.ne.s32.totalorder %s108, %s124
    %p126 = scmp.eq.s32.totalorder %s15, 0
    %p127 = por %p125, %p126
    %s128 = ssub.s32 %s16, %s35
    %s129 = ssub.s32 %s17, %s31
    %s130 = sor.u32 %s128, %s129
    %p131 = scmp.eq.s32.totalorder %s130, 0
    %s133 = sadd.s32 %s132, 1
    %s134 = scalar_select %p131, %s132, %s133
    %p137 = pneg %p131
    %p138 = scmp.eq.s32.totalorder %s9, 7
    %p139 = por %p137, %p138
    %p140 = scmp.ne.s32.totalorder %s132, %s135
    %p141 = scmp.eq.s32.totalorder %s9, 0
    %p142 = por %p140, %p141
    %p143 = scmp.ne.s32.totalorder %s132, %s135
    %p144 = scmp.eq.s32.totalorder %s14, 7
    %p145 = por %p143, %p144
    %p146 = scmp.ne.s32.totalorder %s135, %s136
    %p147 = scmp.eq.s32.totalorder %s14, 0
    %p148 = por %p146, %p147
    %p149 = scmp.ne.s32.totalorder %s135, %s136
    %p150 = scmp.eq.s32.totalorder %s15, 7
    %p151 = por %p149, %p150
    %p153 = scmp.ne.s32.totalorder %s136, %s152
    %p154 = scmp.eq.s32.totalorder %s15, 0
    %p155 = por %p153, %p154
    %p156 = scmp.le.s32.totalorder 1, %s9
    %p157 = scmp.lt.s32.totalorder %s9, 9
    %p158 = pnand %p156, %p157
    %p159 = pneg %p158
    // Predicated region
    $region9: #{jpt1_forward.14} parent=5 // pred_check
      _
    $region10: #{jpt1_forward.14} parent=5 // pred_check_branch
      %161 = sbr.rel (%p158) target = $region12
    $region11: #{jpt1_forward.14} parent=5 // pred_region
      %s162 = ssub.s32 %s9, 1
    $region12: #{jpt1_forward.14} parent=5 // pred_fallthru
      _
    %p163 = scmp.lt.s32.totalorder %s9, 8
    // Predicated region
    $region13: #{jpt1_forward.14} parent=5 // pred_check
      %p164 = pneg %p163
    $region14: #{jpt1_forward.14} parent=5 // pred_check_branch
      %166 = sbr.rel (%p164) target = $region16
    $region15: #{jpt1_forward.14} parent=5 // pred_region
      // Predicated region
      $region17: #{jpt1_forward.14} parent=15 // pred_check
        %p167 = pneg %p50
      $region18: #{jpt1_forward.14} parent=15 // pred_check_branch
        %169 = sbr.rel (%p167) target = $region20
      $region19: #{jpt1_forward.14} parent=15 // pred_region
        %p170 = scmp.lt.s32.totalorder %s16, 7
        %s171 = scalar_select %p170, %s16, 7
        %p172 = scmp.lt.s32.totalorder %s17, 0
        %s173 = scalar_select %p172, %s17, 0
        %s174 = sadd.s32 %s173, %s171
        %s175 = smul.addr %s174, 4
        %s176 = scalar_lea.vmem %s0, %s175
      $region20: #{jpt1_forward.14} parent=15 // pred_fallthru
        _
      // Predicated region
      $region21: #{jpt1_forward.14} parent=15 // pred_check
        %p177 = pneg %p82
      $region22: #{jpt1_forward.14} parent=15 // pred_check_branch
        %179 = sbr.rel (%p177) target = $region24
      $region23: #{jpt1_forward.14} parent=15 // pred_region
        %p180 = scmp.lt.s32.totalorder %s17, %s18
        %s181 = scalar_select %p180, %s17, %s18
        %p182 = scmp.lt.s32.totalorder %s16, 7
        %s183 = scalar_select %p182, %s16, 7
        %p184 = scmp.lt.s32.totalorder %s181, 0
        %s185 = scalar_select %p184, %s181, 0
        %s186 = sadd.s32 %s185, %s183
        %s187 = sadd.s32 %s186, 8
        %s188 = smul.addr %s187, 4
        %s189 = scalar_lea.vmem %s1, %s188
        %p190 = scmp.lt.s32.totalorder %s17, %s18
        %s191 = scalar_select %p190, %s17, %s18
      $region24: #{jpt1_forward.14} parent=15 // pred_fallthru
        _
      // Predicated region
      $region25: #{jpt1_forward.14} parent=15 // pred_check
        %p192 = pneg %p114
      $region26: #{jpt1_forward.14} parent=15 // pred_check_branch
        %194 = sbr.rel (%p192) target = $region28
      $region27: #{jpt1_forward.14} parent=15 // pred_region
        %p195 = scmp.lt.s32.totalorder %s17, %s18
        %s196 = scalar_select %p195, %s17, %s18
        %p197 = scmp.lt.s32.totalorder %s16, 7
        %s198 = scalar_select %p197, %s16, 7
        %p199 = scmp.lt.s32.totalorder %s196, 0
        %s200 = scalar_select %p199, %s196, 0
        %s201 = sadd.s32 %s200, %s198
        %s202 = sadd.s32 %s201, 16
        %s203 = smul.addr %s202, 4
        %s204 = scalar_lea.vmem %s2, %s203
        %p205 = scmp.lt.s32.totalorder %s17, %s18
        %s206 = scalar_select %p205, %s17, %s18
      $region28: #{jpt1_forward.14} parent=15 // pred_fallthru
        _
    $region16: #{jpt1_forward.14} parent=5 // pred_fallthru
      _
    %p207 = scmp.le.s32.totalorder 1, %s9
    %p208 = scmp.lt.s32.totalorder %s9, 9
    %p209 = pnand %p207, %p208
    %p210 = pneg %p209
    // Predicated region
    $region29: #{jpt1_forward.14} parent=5 // pred_check
      _
    $region30: #{jpt1_forward.14} parent=5 // pred_check_branch
      %212 = sbr.rel (%p209) target = $region32
    $region31: #{jpt1_forward.14} parent=5 // pred_region
      %s213 = ssub.s32 %s9, 1
      %p214 = scmp.lt.s32.totalorder %s19, 7
      %s215 = scalar_select %p214, %s19, 7
      %p216 = scmp.lt.s32.totalorder %s20, 0
      %s217 = scalar_select %p216, %s20, 0
      %s218 = sadd.s32 %s217, %s215
      %s219 = smul.addr %s218, 4
      %s220 = scalar_lea.vmem %s0, %s219
      %p221 = pneg %p56
      %p222 = pneg %p53
      %p223 = scmp.lt.s32.totalorder %s20, %s21
      %s224 = scalar_select %p223, %s20, %s21
      %p225 = scmp.lt.s32.totalorder %s19, 7
      %s226 = scalar_select %p225, %s19, 7
      %p227 = scmp.lt.s32.totalorder %s224, 0
      %s228 = scalar_select %p227, %s224, 0
      %s229 = sadd.s32 %s228, %s226
      %s230 = sadd.s32 %s229, 8
      %s231 = smul.addr %s230, 4
      %s232 = scalar_lea.vmem %s1, %s231
      %p233 = pneg %p88
      %p234 = pneg %p85
      %p235 = scmp.lt.s32.totalorder %s20, %s21
      %s236 = scalar_select %p235, %s20, %s21
      %p237 = scmp.lt.s32.totalorder %s19, 7
      %s238 = scalar_select %p237, %s19, 7
      %p239 = scmp.lt.s32.totalorder %s236, 0
      %s240 = scalar_select %p239, %s236, 0
      %s241 = sadd.s32 %s240, %s238
      %s242 = sadd.s32 %s241, 16
      %s243 = smul.addr %s242, 4
      %s244 = scalar_lea.vmem %s2, %s243
      %p245 = pneg %p120
      %p246 = pneg %p117
      %p247 = pneg %p148
      %p248 = pneg %p145
      %p249 = scmp.lt.s32.totalorder %s19, 7
      %s250 = scalar_select %p249, %s19, 7
      %p251 = scmp.lt.s32.totalorder %s20, 0
      %s252 = scalar_select %p251, %s20, 0
      %s253 = sadd.s32 %s252, %s250
      %s254 = smul.addr %s253, 4
      %s255 = scalar_lea.vmem %s3, %s254
      %p256 = scmp.lt.s32.totalorder %s19, 7
      %s257 = scalar_select %p256, %s19, 7
      %p258 = scmp.lt.s32.totalorder %s20, 0
      %s259 = scalar_select %p258, %s20, 0
      %s260 = sadd.s32 %s259, %s257
      %s261 = smul.addr %s260, 4
      %s262 = scalar_lea.vmem %s0, %s261
      %p263 = scmp.lt.s32.totalorder %s20, %s21
      %s264 = scalar_select %p263, %s20, %s21
      %p265 = scmp.lt.s32.totalorder %s19, 7
      %s266 = scalar_select %p265, %s19, 7
      %p267 = scmp.lt.s32.totalorder %s264, 0
      %s268 = scalar_select %p267, %s264, 0
      %s269 = sadd.s32 %s268, %s266
      %s270 = sadd.s32 %s269, 8
      %s271 = smul.addr %s270, 4
      %s272 = scalar_lea.vmem %s1, %s271
      %p273 = scmp.lt.s32.totalorder %s20, %s21
      %s274 = scalar_select %p273, %s20, %s21
      %p275 = scmp.lt.s32.totalorder %s20, %s21
      %s276 = scalar_select %p275, %s20, %s21
      %p277 = scmp.lt.s32.totalorder %s19, 7
      %s278 = scalar_select %p277, %s19, 7
      %p279 = scmp.lt.s32.totalorder %s276, 0
      %s280 = scalar_select %p279, %s276, 0
      %s281 = sadd.s32 %s280, %s278
      %s282 = sadd.s32 %s281, 16
      %s283 = smul.addr %s282, 4
      %s284 = scalar_lea.vmem %s2, %s283
      %p285 = scmp.lt.s32.totalorder %s20, %s21
      %s286 = scalar_select %p285, %s20, %s21
      %p287 = scmp.lt.s32.totalorder %s19, 7
      %s288 = scalar_select %p287, %s19, 7
      %p289 = scmp.lt.s32.totalorder %s20, 0
      %s290 = scalar_select %p289, %s20, 0
      %s291 = sadd.s32 %s290, %s288
      %s292 = smul.addr %s291, 4
      %s293 = scalar_lea.vmem %s3, %s292
      %p296 = scmp.eq.s32.totalorder %s21, 0
      // Predicated region
      $region33: #{jpt1_forward.14} parent=31 // pred_check
        %p297 = pneg %p296
      $region34: #{jpt1_forward.14} parent=31 // pred_check_branch
        %299 = sbr.rel (%p297) target = $region36
      $region35: #{jpt1_forward.14} parent=31 // pred_region
        %vm300 = vcmask 7168
        %301 = vst.msk [vmem:[#allocation2] sm:$0xff] %vm300, -inf
        %302 = vst.msk [vmem:[#allocation3] sm:$0xff] %vm300, 0.0
        %303 = vst [vmem:[#allocation4] sm:$0xff] 0.0
      $region36: #{jpt1_forward.14} parent=31 // pred_fallthru
        _
      %p304 = scmp.lt.s32.totalorder %s21, %s20
      // Predicated region
      $region37: #{jpt1_forward.14} parent=31 // pred_check
        %p305 = pneg %p304
      $region38: #{jpt1_forward.14} parent=31 // pred_check_branch
        %307 = sbr.rel (%p305) target = $region40
      $region39: #{jpt1_forward.14} parent=31 // pred_region
        %v308 = vld [vmem:[%s262] sm:$0xf]
        %v309 = vmul.bf16 %v308, 1052065461
        %v310 = vld [vmem:[%s272] sm:$0xf]
        %v311 = vld [vmem:[%s284] sm:$0xf]
        %312 = vmatprep.subr.bf16.mxu0 0
        %313 = vmatpush1.bf16.xpose.msra.mxu0 %v310
        %314 = vmatprep.subr.bf16.mxu0 0
        %315 = vmatpush1.bf16.xpose.msra.mxu0 0
        %316 = vmatprep.subr.bf16.mxu0 0
        %317 = vmatpush1.bf16.xpose.msra.mxu0 0
        %318 = vmatprep.subr.bf16.mxu0 0
        %319 = vmatpush1.bf16.xpose.msra.mxu0 0
        %320 = vmatprep.subr.bf16.mxu0 0
        %321 = vmatpush1.bf16.xpose.msra.mxu0 0
        %322 = vmatprep.subr.bf16.mxu0 0
        %323 = vmatpush1.bf16.xpose.msra.mxu0 0
        %324 = vmatprep.subr.bf16.mxu0 0
        %325 = vmatpush1.bf16.xpose.msra.mxu0 0
        %326 = vmatprep.subr.bf16.mxu0 0
        %327 = vmatpush1.bf16.xpose.msra.mxu0 0
        %328 = vmatprep.subr.bf16.mxu0 0
        %329 = vmatpush1.bf16.xpose.msra.mxu0 0
        %330 = vmatprep.subr.bf16.mxu0 0
        %331 = vmatpush1.bf16.xpose.msra.mxu0 0
        %332 = vmatprep.subr.bf16.mxu0 0
        %333 = vmatpush1.bf16.xpose.msra.mxu0 0
        %334 = vmatprep.subr.bf16.mxu0 0
        %335 = vmatpush1.bf16.xpose.msra.mxu0 0
        %336 = vmatprep.subr.bf16.mxu0 0
        %337 = vmatpush1.bf16.xpose.msra.mxu0 0
        %338 = vmatprep.subr.bf16.mxu0 0
        %339 = vmatpush1.bf16.xpose.msra.mxu0 0
        %340 = vmatprep.subr.bf16.mxu0 0
        %341 = vmatpush1.bf16.xpose.msra.mxu0 0
        %342 = vmatprep.subr.bf16.mxu0 0
        %343 = vmatpush1.bf16.xpose.msra.mxu0 0
        %344 = vmatprep.mubr.bf16.mxu0 0
        %345 = vmatmul.mubr.bf16.gmra.mrb[0].mxu0 %v309
        %v346 = vpop.f32.mrb[0].mxu0
        %v347 = vadd.f32 0.0, %v346
        %v348 = vpop.f32.mrb[0].mxu0
        %v349 = vpop.f32.mrb[0].mxu0
        %v350 = vpop.f32.mrb[0].mxu0
        %351 = vdwg.mxu0
        %v352 = vld [vmem:[#allocation2] sm:$0xff]
        %vm353 = vcmask 64512
        %v354 = vsel %vm353, %v347, -inf
        %355 = vmax.xlane.f32.xlu0 %v354
        %v356 = vpop.xlane.xlu0 %355
        %v357 = vmax.f32 %v352, %v356
        %v358 = vsub.f32 %v352, %v357
        %v359 = vmul.f32 %v358, 1.442695
        %v360 = vpow.pop %v359
        %362 = vset.pattern.permute.xlu0 0
        %363 = vperm.xlu0 %362, %v357
        %v364 = vpop.permute.xlu0 %363
        %v366 = vsub.f32 %v347, %v364
        %v367 = vmul.f32 %v366, 1.442695
        %v368 = vpow.pop %v367
        %v369 = vld [vmem:[#allocation3] sm:$0xff]
        %v370 = vmul.f32 %v360, %v369
        %v371 = vsel %vm353, %v368, 0.0
        %372 = vadd.xlane.f32.xlu0 %v371
        %v373 = vpop.xlane.xlu0 %372
        %v374 = vadd.f32 %v370, %v373
        %vm375 = vcmask 7168
        %376 = vst.msk [vmem:[#allocation3] sm:$0xff] %vm375, %v374
        %v377 = vld [vmem:[#allocation4] sm:$0xff]
        %379 = vset.pattern.permute.xlu0 0
        %380 = vperm.xlu0 %379, %v360
        %v381 = vpop.permute.xlu0 %380
        %v383 = vmul.f32 %v381, %v377
        %v384 = vpack.c.bf16 %v368, %v368
        %v386 = vsel %vm353, %v384, 0
        %vm388 = vcmask 1043456
        %v390 = vsel %vm388, %v311, 0
        %392 = vmatprep.subr.bf16.mxu0 0
        %393 = vmatpush1.bf16.msra.mxu0 %v390
        %394 = vmatprep.subr.bf16.mxu0 0
        %395 = vmatpush1.bf16.msra.mxu0 0
        %396 = vmatprep.subr.bf16.mxu0 0
        %397 = vmatpush1.bf16.msra.mxu0 0
        %398 = vmatprep.subr.bf16.mxu0 0
        %399 = vmatpush1.bf16.msra.mxu0 0
        %400 = vmatprep.subr.bf16.mxu0 0
        %401 = vmatpush1.bf16.msra.mxu0 0
        %402 = vmatprep.subr.bf16.mxu0 0
        %403 = vmatpush1.bf16.msra.mxu0 0
        %404 = vmatprep.subr.bf16.mxu0 0
        %405 = vmatpush1.bf16.msra.mxu0 0
        %406 = vmatprep.subr.bf16.mxu0 0
        %407 = vmatpush1.bf16.msra.mxu0 0
        %408 = vmatprep.subr.bf16.mxu0 0
        %409 = vmatpush1.bf16.msra.mxu0 0
        %410 = vmatprep.subr.bf16.mxu0 0
        %411 = vmatpush1.bf16.msra.mxu0 0
        %412 = vmatprep.subr.bf16.mxu0 0
        %413 = vmatpush1.bf16.msra.mxu0 0
        %414 = vmatprep.subr.bf16.mxu0 0
        %415 = vmatpush1.bf16.msra.mxu0 0
        %416 = vmatprep.subr.bf16.mxu0 0
        %417 = vmatpush1.bf16.msra.mxu0 0
        %418 = vmatprep.subr.bf16.mxu0 0
        %419 = vmatpush1.bf16.msra.mxu0 0
        %420 = vmatprep.subr.bf16.mxu0 0
        %421 = vmatpush1.bf16.msra.mxu0 0
        %422 = vmatprep.subr.bf16.mxu0 0
        %423 = vmatpush1.bf16.msra.mxu0 0
        %424 = vmatprep.mubr.bf16.mxu0 0
        %425 = vmatmul.mubr.bf16.gmra.mrb[0].mxu0 %v386
        %v426 = vpop.f32.mrb[0].mxu0
        %v427 = vadd.f32 0.0, %v426
        %v428 = vpop.f32.mrb[0].mxu0
        %v429 = vpop.f32.mrb[0].mxu0
        %v430 = vpop.f32.mrb[0].mxu0
        %431 = vdwg.mxu0
        %v432 = vadd.f32 %v383, %v427
        %433 = vst [vmem:[#allocation4] sm:$0xff] %v432
        %434 = vst.msk [vmem:[#allocation2] sm:$0xff] %vm375, %v357
      $region40: #{jpt1_forward.14} parent=31 // pred_fallthru
        _
      %p435 = scmp.eq.s32.totalorder %s21, %s20
      // Predicated region
      $region41: #{jpt1_forward.14} parent=31 // pred_check
        %p436 = pneg %p435
      $region42: #{jpt1_forward.14} parent=31 // pred_check_branch
        %438 = sbr.rel (%p436) target = $region44
      $region43: #{jpt1_forward.14} parent=31 // pred_region
        %v439 = vld [vmem:[%s262] sm:$0xf]
        %v440 = vmul.bf16 %v439, 1052065461
        %v441 = vld [vmem:[%s272] sm:$0xf]
        %v442 = vld [vmem:[%s284] sm:$0xf]
        %443 = vmatprep.subr.bf16.mxu0 0
        %444 = vmatpush1.bf16.xpose.msra.mxu0 %v441
        %445 = vmatprep.subr.bf16.mxu0 0
        %446 = vmatpush1.bf16.xpose.msra.mxu0 0
        %447 = vmatprep.subr.bf16.mxu0 0
        %448 = vmatpush1.bf16.xpose.msra.mxu0 0
        %449 = vmatprep.subr.bf16.mxu0 0
        %450 = vmatpush1.bf16.xpose.msra.mxu0 0
        %451 = vmatprep.subr.bf16.mxu0 0
        %452 = vmatpush1.bf16.xpose.msra.mxu0 0
        %453 = vmatprep.subr.bf16.mxu0 0
        %454 = vmatpush1.bf16.xpose.msra.mxu0 0
        %455 = vmatprep.subr.bf16.mxu0 0
        %456 = vmatpush1.bf16.xpose.msra.mxu0 0
        %457 = vmatprep.subr.bf16.mxu0 0
        %458 = vmatpush1.bf16.xpose.msra.mxu0 0
        %459 = vmatprep.subr.bf16.mxu0 0
        %460 = vmatpush1.bf16.xpose.msra.mxu0 0
        %461 = vmatprep.subr.bf16.mxu0 0
        %462 = vmatpush1.bf16.xpose.msra.mxu0 0
        %463 = vmatprep.subr.bf16.mxu0 0
        %464 = vmatpush1.bf16.xpose.msra.mxu0 0
        %465 = vmatprep.subr.bf16.mxu0 0
        %466 = vmatpush1.bf16.xpose.msra.mxu0 0
        %467 = vmatprep.subr.bf16.mxu0 0
        %468 = vmatpush1.bf16.xpose.msra.mxu0 0
        %469 = vmatprep.subr.bf16.mxu0 0
        %470 = vmatpush1.bf16.xpose.msra.mxu0 0
        %471 = vmatprep.subr.bf16.mxu0 0
        %472 = vmatpush1.bf16.xpose.msra.mxu0 0
        %473 = vmatprep.subr.bf16.mxu0 0
        %474 = vmatpush1.bf16.xpose.msra.mxu0 0
        %475 = vmatprep.mubr.bf16.mxu0 0
        %476 = vmatmul.mubr.bf16.gmra.mrb[0].mxu0 %v440
        %v477 = vpop.f32.mrb[0].mxu0
        %v478 = vadd.f32 0.0, %v477
        %v479 = vpop.f32.mrb[0].mxu0
        %v480 = vpop.f32.mrb[0].mxu0
        %v481 = vpop.f32.mrb[0].mxu0
        %482 = vdwg.mxu0
        %s483 = smul.u32 %s20, 8
        %v484 = vlaneseq
        %v485 = vshrl.u32 %v484, 7
        %v486 = vstv %s483
        %v487 = vadd.s32 %v486, %v485
        %s488 = smul.u32 %s21, 8
        %v489 = vlaneseq
        %v490 = vand.u32 %v489, 127
        %v491 = vstv %s488
        %v492 = vadd.s32 %v491, %v490
        %vm493 = vcmp.gt.s32.totalorder %v492, %v487
        %vm494 = vcmp.ge.s32.totalorder %v492, 8
        %vm495 = vmor %vm493, %vm494
        %v496 = vsel %vm495, -1e+30, %v478
        %v497 = vld [vmem:[#allocation2] sm:$0xff]
        %vm498 = vcmask 64512
        %v499 = vsel %vm498, %v496, -inf
        %500 = vmax.xlane.f32.xlu0 %v499
        %v501 = vpop.xlane.xlu0 %500
        %v502 = vmax.f32 %v497, %v501
        %v503 = vsub.f32 %v497, %v502
        %v504 = vmul.f32 %v503, 1.442695
        %v505 = vpow.pop %v504
        %507 = vset.pattern.permute.xlu0 0
        %508 = vperm.xlu0 %507, %v502
        %v509 = vpop.permute.xlu0 %508
        %v511 = vsub.f32 %v496, %v509
        %v512 = vmul.f32 %v511, 1.442695
        %v513 = vpow.pop %v512
        %v514 = vld [vmem:[#allocation3] sm:$0xff]
        %v515 = vmul.f32 %v505, %v514
        %v516 = vsel %vm498, %v513, 0.0
        %517 = vadd.xlane.f32.xlu0 %v516
        %v518 = vpop.xlane.xlu0 %517
        %v519 = vadd.f32 %v515, %v518
        %vm520 = vcmask 7168
        %521 = vst.msk [vmem:[#allocation3] sm:$0xff] %vm520, %v519
        %v522 = vld [vmem:[#allocation4] sm:$0xff]
        %524 = vset.pattern.permute.xlu0 0
        %525 = vperm.xlu0 %524, %v505
        %v526 = vpop.permute.xlu0 %525
        %v528 = vmul.f32 %v526, %v522
        %v529 = vpack.c.bf16 %v513, %v513
        %v531 = vsel %vm498, %v529, 0
        %vm533 = vcmask 1043456
        %v535 = vsel %vm533, %v442, 0
        %537 = vmatprep.subr.bf16.mxu0 0
        %538 = vmatpush1.bf16.msra.mxu0 %v535
        %539 = vmatprep.subr.bf16.mxu0 0
        %540 = vmatpush1.bf16.msra.mxu0 0
        %541 = vmatprep.subr.bf16.mxu0 0
        %542 = vmatpush1.bf16.msra.mxu0 0
        %543 = vmatprep.subr.bf16.mxu0 0
        %544 = vmatpush1.bf16.msra.mxu0 0
        %545 = vmatprep.subr.bf16.mxu0 0
        %546 = vmatpush1.bf16.msra.mxu0 0
        %547 = vmatprep.subr.bf16.mxu0 0
        %548 = vmatpush1.bf16.msra.mxu0 0
        %549 = vmatprep.subr.bf16.mxu0 0
        %550 = vmatpush1.bf16.msra.mxu0 0
        %551 = vmatprep.subr.bf16.mxu0 0
        %552 = vmatpush1.bf16.msra.mxu0 0
        %553 = vmatprep.subr.bf16.mxu0 0
        %554 = vmatpush1.bf16.msra.mxu0 0
        %555 = vmatprep.subr.bf16.mxu0 0
        %556 = vmatpush1.bf16.msra.mxu0 0
        %557 = vmatprep.subr.bf16.mxu0 0
        %558 = vmatpush1.bf16.msra.mxu0 0
        %559 = vmatprep.subr.bf16.mxu0 0
        %560 = vmatpush1.bf16.msra.mxu0 0
        %561 = vmatprep.subr.bf16.mxu0 0
        %562 = vmatpush1.bf16.msra.mxu0 0
        %563 = vmatprep.subr.bf16.mxu0 0
        %564 = vmatpush1.bf16.msra.mxu0 0
        %565 = vmatprep.subr.bf16.mxu0 0
        %566 = vmatpush1.bf16.msra.mxu0 0
        %567 = vmatprep.subr.bf16.mxu0 0
        %568 = vmatpush1.bf16.msra.mxu0 0
        %569 = vmatprep.mubr.bf16.mxu0 0
        %570 = vmatmul.mubr.bf16.gmra.mrb[0].mxu0 %v531
        %v571 = vpop.f32.mrb[0].mxu0
        %v572 = vadd.f32 0.0, %v571
        %v573 = vpop.f32.mrb[0].mxu0
        %v574 = vpop.f32.mrb[0].mxu0
        %v575 = vpop.f32.mrb[0].mxu0
        %576 = vdwg.mxu0
        %v577 = vadd.f32 %v528, %v572
        %578 = vst [vmem:[#allocation4] sm:$0xff] %v577
        %579 = vst.msk [vmem:[#allocation2] sm:$0xff] %vm520, %v502
      $region44: #{jpt1_forward.14} parent=31 // pred_fallthru
        _
      // Predicated region
      $region45: #{jpt1_forward.14} parent=31 // pred_check
        %p580 = pneg %p296
      $region46: #{jpt1_forward.14} parent=31 // pred_check_branch
        %582 = sbr.rel (%p580) target = $region48
      $region47: #{jpt1_forward.14} parent=31 // pred_region
        %v583 = vld [vmem:[#allocation3] sm:$0xff]
        %v584 = vrcp.pop %v583
        %v585 = vld [vmem:[#allocation4] sm:$0xff]
        %587 = vset.pattern.permute.xlu0 0
        %588 = vperm.xlu0 %587, %v584
        %v589 = vpop.permute.xlu0 %588
        %v591 = vmul.f32 %v585, %v589
        %v592 = vpack.c.bf16 %v591, %v591
        %593 = vst [vmem:[%s293] sm:$0xf] %v592
      $region48: #{jpt1_forward.14} parent=31 // pred_fallthru
        _
      %p594 = scmp.lt.s32.totalorder %s19, 7
      %s595 = scalar_select %p594, %s19, 7
      %p596 = scmp.lt.s32.totalorder %s20, 0
      %s597 = scalar_select %p596, %s20, 0
      %s598 = sadd.s32 %s597, %s595
      %s599 = smul.addr %s598, 4
      %s600 = scalar_lea.vmem %s3, %s599
      // Predicated region
      $region49: #{jpt1_forward.14} parent=31 // pred_check
        %p601 = pneg %p145
      $region50: #{jpt1_forward.14} parent=31 // pred_check_branch
        %603 = sbr.rel (%p601) target = $region52
      $region51: #{jpt1_forward.14} parent=31 // pred_region
        _
      $region52: #{jpt1_forward.14} parent=31 // pred_fallthru
        _
    $region32: #{jpt1_forward.14} parent=5 // pred_fallthru
      _
    %p604 = scmp.le.s32.totalorder 2, %s9
    // Predicated region
    $region53: #{jpt1_forward.14} parent=5 // pred_check
      %p605 = pneg %p604
    $region54: #{jpt1_forward.14} parent=5 // pred_check_branch
      %607 = sbr.rel (%p605) target = $region56
    $region55: #{jpt1_forward.14} parent=5 // pred_region
      %s608 = ssub.s32 %s9, 2
      // Predicated region
      $region57: #{jpt1_forward.14} parent=55 // pred_check
        %p609 = pneg %p151
      $region58: #{jpt1_forward.14} parent=55 // pred_check_branch
        %611 = sbr.rel (%p609) target = $region60
      $region59: #{jpt1_forward.14} parent=55 // pred_region
        %p612 = scmp.lt.s32.totalorder %s22, 7
        %s613 = scalar_select %p612, %s22, 7
        %p614 = scmp.lt.s32.totalorder %s23, 0
        %s615 = scalar_select %p614, %s23, 0
        %s616 = sadd.s32 %s615, %s613
        %s617 = smul.addr %s616, 4
        %s618 = scalar_lea.vmem %s3, %s617
      $region60: #{jpt1_forward.14} parent=55 // pred_fallthru
        _
    $region56: #{jpt1_forward.14} parent=5 // pred_fallthru
      _
  $region6: #{jpt1_forward.14} parent=0 // loop_footer
    %s13 = sadd.s32 1, %s9
  $region7: #{jpt1_forward.14} parent=0 // loop_footer_branch
    %8 = sbr.rel target = $region3
  $region8: #{jpt1_forward.14} parent=0 // loop_exit
    _

// kernel: jpt1_forward.15
$region0: #{jpt1_forward.15}
  #allocation0 [shape = 'u32[]', space=smem, size = 0x4, offset = 0x4, fixed_abs, tag = 'smem constant byte address 0x4 - core index']
  #allocation1 [shape = 'u32[144,128]{1,0:T(1,128)}', space=vmem, size = 0x12000, scoped, tag = 'internal scratch']
  %s0 = inlined_call_operand.vmem [shape: bf16[16,128], index: 0, kind: input, shape index: {}]
  %s1 = inlined_call_operand.vmem [shape: bf16[128,128], index: 1, kind: input, shape index: {}]
  %s2 = inlined_call_operand.vmem [shape: f32[1,128], index: 2, kind: input, shape index: {}]
  %s3 = inlined_call_operand.vmem [shape: bf16[16,128], index: 3, kind: input, shape index: {}]
  %s4 = inlined_call_operand.vmem [shape: bf16[16,128], index: 4, kind: output, shape index: {}]
  %s5 = sld [smem:[#allocation0]]
  $region26: #{jpt1_forward.15} parent=0
    _
  %s7 = ssub.s32 1, %s5
  %s8 = scalar_select 0, %s7, %s5
  // Predicated region
  $region2: #{jpt1_forward.15} parent=0 // pred_check
    _
  $region3: #{jpt1_forward.15} parent=0 // pred_check_branch
    %10 = sbr.rel (0) target = $region5
  $region4: #{jpt1_forward.15} parent=0 // pred_region
    _
  $region5: #{jpt1_forward.15} parent=0 // pred_fallthru
    _
  // Predicated region
  $region6: #{jpt1_forward.15} parent=0 // pred_check
    _
  $region7: #{jpt1_forward.15} parent=0 // pred_check_branch
    %12 = sbr.rel (0) target = $region9
  $region8: #{jpt1_forward.15} parent=0 // pred_region
    _
  $region9: #{jpt1_forward.15} parent=0 // pred_fallthru
    _
  // Predicated region
  $region10: #{jpt1_forward.15} parent=0 // pred_check
    _
  $region11: #{jpt1_forward.15} parent=0 // pred_check_branch
    %14 = sbr.rel (0) target = $region13
  $region12: #{jpt1_forward.15} parent=0 // pred_region
    _
  $region13: #{jpt1_forward.15} parent=0 // pred_fallthru
    _
  // Predicated region
  $region14: #{jpt1_forward.15} parent=0 // pred_check
    _
  $region15: #{jpt1_forward.15} parent=0 // pred_check_branch
    %16 = sbr.rel (0) target = $region17
  $region16: #{jpt1_forward.15} parent=0 // pred_region
    _
  $region17: #{jpt1_forward.15} parent=0 // pred_fallthru
    _
  %v18 = vld [vmem:[%s0] sm:$0xf]
  %v19 = vld [vmem:[%s0 + $0x4] sm:$0xf]
  %v20 = vld [vmem:[%s1] sm:$0xf]
  %v21 = vld [vmem:[%s1 + $0x4] sm:$0xf]
  %v22 = vld [vmem:[%s1 + $0x8] sm:$0xf]
  %v23 = vld [vmem:[%s1 + $0xc] sm:$0xf]
  %v24 = vld [vmem:[%s1 + $0x10] sm:$0xf]
  %v25 = vld [vmem:[%s1 + $0x14] sm:$0xf]
  %v26 = vld [vmem:[%s1 + $0x18] sm:$0xf]
  %v27 = vld [vmem:[%s1 + $0x1c] sm:$0xf]
  %v28 = vld [vmem:[%s1 + $0x20] sm:$0xf]
  %v29 = vld [vmem:[%s1 + $0x24] sm:$0xf]
  %v30 = vld [vmem:[%s1 + $0x28] sm:$0xf]
  %v31 = vld [vmem:[%s1 + $0x2c] sm:$0xf]
  %v32 = vld [vmem:[%s1 + $0x30] sm:$0xf]
  %v33 = vld [vmem:[%s1 + $0x34] sm:$0xf]
  %v34 = vld [vmem:[%s1 + $0x38] sm:$0xf]
  %v35 = vld [vmem:[%s1 + $0x3c] sm:$0xf]
  %v36 = vld [vmem:[%s2] sm:$0x1]
  %v38 = vlaneseq
  %v39 = vshrl.u32 %v38, 7
  %v40 = vsub.s32 0, %v39
  %v41 = vrot.slane %v36, %v40
  %v45 = vunpack.c.l.b16 %v18
  %v46 = vunpack.c.l.b16 %v19
  %v47 = vpack.c.b16 %v46, %v45
  %v65 = vunpack.c.l.b16 %v20
  %v66 = vunpack.c.l.b16 %v21
  %v67 = vunpack.c.l.b16 %v22
  %v68 = vunpack.c.l.b16 %v23
  %v69 = vunpack.c.l.b16 %v24
  %v70 = vunpack.c.l.b16 %v25
  %v71 = vunpack.c.l.b16 %v26
  %v72 = vunpack.c.l.b16 %v27
  %v73 = vunpack.c.l.b16 %v28
  %v74 = vunpack.c.l.b16 %v29
  %v75 = vunpack.c.l.b16 %v30
  %v76 = vunpack.c.l.b16 %v31
  %v77 = vunpack.c.l.b16 %v32
  %v78 = vunpack.c.l.b16 %v33
  %v79 = vunpack.c.l.b16 %v34
  %v80 = vunpack.c.l.b16 %v35
  %v81 = vpack.c.b16 %v66, %v65
  %v82 = vpack.c.b16 %v68, %v67
  %v83 = vpack.c.b16 %v70, %v69
  %v84 = vpack.c.b16 %v72, %v71
  %v85 = vpack.c.b16 %v74, %v73
  %v86 = vpack.c.b16 %v76, %v75
  %v87 = vpack.c.b16 %v78, %v77
  %v88 = vpack.c.b16 %v80, %v79
  %97 = vmatprep.subr.bf16.mxu0 0
  %98 = vmatpush1.bf16.msra.mxu0 %v81
  %99 = vmatprep.subr.bf16.mxu0 0
  %100 = vmatpush1.bf16.msra.mxu0 %v82
  %101 = vmatprep.subr.bf16.mxu0 0
  %102 = vmatpush1.bf16.msra.mxu0 %v83
  %103 = vmatprep.subr.bf16.mxu0 0
  %104 = vmatpush1.bf16.msra.mxu0 %v84
  %105 = vmatprep.subr.bf16.mxu0 0
  %106 = vmatpush1.bf16.msra.mxu0 %v85
  %107 = vmatprep.subr.bf16.mxu0 0
  %108 = vmatpush1.bf16.msra.mxu0 %v86
  %109 = vmatprep.subr.bf16.mxu0 0
  %110 = vmatpush1.bf16.msra.mxu0 %v87
  %111 = vmatprep.subr.bf16.mxu0 0
  %112 = vmatpush1.bf16.msra.mxu0 %v88
  %113 = vmatprep.subr.bf16.mxu0 0
  %114 = vmatpush1.bf16.msra.mxu0 0
  %115 = vmatprep.subr.bf16.mxu0 0
  %116 = vmatpush1.bf16.msra.mxu0 0
  %117 = vmatprep.subr.bf16.mxu0 0
  %118 = vmatpush1.bf16.msra.mxu0 0
  %119 = vmatprep.subr.bf16.mxu0 0
  %120 = vmatpush1.bf16.msra.mxu0 0
  %121 = vmatprep.subr.bf16.mxu0 0
  %122 = vmatpush1.bf16.msra.mxu0 0
  %123 = vmatprep.subr.bf16.mxu0 0
  %124 = vmatpush1.bf16.msra.mxu0 0
  %125 = vmatprep.subr.bf16.mxu0 0
  %126 = vmatpush1.bf16.msra.mxu0 0
  %127 = vmatprep.subr.bf16.mxu0 0
  %128 = vmatpush1.bf16.msra.mxu0 0
  %129 = vmatprep.mubr.bf16.mxu0 0
  %130 = vmatmul.mubr.bf16.gmra.mrb[0].mxu0 %v47
  %v131 = vpop.f32.mrb[0].mxu0
  %v132 = vadd.f32 %v41, %v131
  %v133 = vpop.f32.mrb[0].mxu0
  %v134 = vpop.f32.mrb[0].mxu0
  %v135 = vadd.f32 %v41, %v134
  %v136 = vpop.f32.mrb[0].mxu0
  %137 = vdwg.mxu0
  %v138 = vld [vmem:[%s3] sm:$0xf]
  %v139 = vld [vmem:[%s3 + $0x4] sm:$0xf]
  %v140 = vunpack.c.l.bf16 %v138
  %v141 = vunpack.c.l.bf16 %v139
  %v142 = vadd.f32 %v132, %v140
  %v143 = vadd.f32 %v135, %v141
  %v144 = vpack.c.bf16 %v143, %v142
  %v146 = vunpack.c.l.b16 %v144
  %v147 = vunpack.c.h.b16 %v144
  %v148 = vpack.c.b16 %v146, %v146
  %v149 = vpack.c.b16 %v147, %v147
  %152 = vst [vmem:[%s4] sm:$0xf] %v148
  %153 = vst [vmem:[%s4 + $0x4] sm:$0xf] %v149
  // Predicated region
  $region18: #{jpt1_forward.15} parent=0 // pred_check
    _
  $region19: #{jpt1_forward.15} parent=0 // pred_check_branch
    %155 = sbr.rel (0) target = $region21
  $region20: #{jpt1_forward.15} parent=0 // pred_region
    _
  $region21: #{jpt1_forward.15} parent=0 // pred_fallthru
    _
  // Predicated region
  $region22: #{jpt1_forward.15} parent=0 // pred_check
    _
  $region23: #{jpt1_forward.15} parent=0 // pred_check_branch
    %157 = sbr.rel (0) target = $region25
  $region24: #{jpt1_forward.15} parent=0 // pred_region
    _
  $region25: #{jpt1_forward.15} parent=0 // pred_fallthru
    _

// kernel: jpt1_forward.16
$region0: #{jpt1_forward.16}
  #allocation0 [shape = 'u32[]', space=smem, size = 0x4, offset = 0x4, fixed_abs, tag = 'smem constant byte address 0x4 - core index']
  #allocation1 [shape = 'u32[144,128]{1,0:T(1,128)}', space=vmem, size = 0x12000, scoped, tag = 'internal scratch']
  #allocation2 [shape = 'bf16[16,128]{1,0:T(16,128)(2,1)}', space=vmem, size = 0x1000, scoped, tag = 'scratch operand']
  %s0 = inlined_call_operand.vmem [shape: bf16[16,128], index: 0, kind: input, shape index: {}]
  %s1 = inlined_call_operand.vmem [shape: bf16[128,128], index: 1, kind: input, shape index: {}]
  %s2 = inlined_call_operand.vmem [shape: f32[1,128], index: 2, kind: input, shape index: {}]
  %s3 = inlined_call_operand.vmem [shape: f32[1,128], index: 3, kind: input, shape index: {}]
  %s4 = inlined_call_operand.vmem [shape: f32[1,128], index: 4, kind: input, shape index: {}]
  %s5 = inlined_call_operand.vmem [shape: bf16[16,128], index: 5, kind: output, shape index: {}]
  %s6 = sld [smem:[#allocation0]]
  $region34: #{jpt1_forward.16} parent=0
    _
  %s8 = ssub.s32 1, %s6
  %s9 = scalar_select 0, %s8, %s6
  // Predicated region
  $region2: #{jpt1_forward.16} parent=0 // pred_check
    _
  $region3: #{jpt1_forward.16} parent=0 // pred_check_branch
    %11 = sbr.rel (0) target = $region5
  $region4: #{jpt1_forward.16} parent=0 // pred_region
    _
  $region5: #{jpt1_forward.16} parent=0 // pred_fallthru
    _
  // Predicated region
  $region6: #{jpt1_forward.16} parent=0 // pred_check
    _
  $region7: #{jpt1_forward.16} parent=0 // pred_check_branch
    %13 = sbr.rel (0) target = $region9
  $region8: #{jpt1_forward.16} parent=0 // pred_region
    _
  $region9: #{jpt1_forward.16} parent=0 // pred_fallthru
    _
  // Predicated region
  $region10: #{jpt1_forward.16} parent=0 // pred_check
    _
  $region11: #{jpt1_forward.16} parent=0 // pred_check_branch
    %15 = sbr.rel (0) target = $region13
  $region12: #{jpt1_forward.16} parent=0 // pred_region
    _
  $region13: #{jpt1_forward.16} parent=0 // pred_fallthru
    _
  // Predicated region
  $region14: #{jpt1_forward.16} parent=0 // pred_check
    _
  $region15: #{jpt1_forward.16} parent=0 // pred_check_branch
    %17 = sbr.rel (0) target = $region17
  $region16: #{jpt1_forward.16} parent=0 // pred_region
    _
  $region17: #{jpt1_forward.16} parent=0 // pred_fallthru
    _
  // Predicated region
  $region18: #{jpt1_forward.16} parent=0 // pred_check
    _
  $region19: #{jpt1_forward.16} parent=0 // pred_check_branch
    %19 = sbr.rel (0) target = $region21
  $region20: #{jpt1_forward.16} parent=0 // pred_region
    _
  $region21: #{jpt1_forward.16} parent=0 // pred_fallthru
    _
  %p21 = scmp.eq.s32.totalorder 0, 0
  // Predicated region
  $region22: #{jpt1_forward.16} parent=0 // pred_check
    %p22 = pneg %p21
  $region23: #{jpt1_forward.16} parent=0 // pred_check_branch
    %24 = sbr.rel (%p22) target = $region25
  $region24: #{jpt1_forward.16} parent=0 // pred_region
    %v25 = vld [vmem:[%s0] sm:$0xf]
    %v26 = vld [vmem:[%s0 + $0x4] sm:$0xf]
    %v27 = vunpack.c.l.bf16 %v25
    %v28 = vunpack.c.l.bf16 %v26
    %29 = vadd.xlane.f32.xlu0 %v27
    %v30 = vpop.xlane.xlu0 %29
    %31 = vadd.xlane.f32.xlu0 %v28
    %v32 = vpop.xlane.xlu0 %31
    %v33 = vmul.f32 %v30, 0.03125
    %v34 = vmul.f32 %v32, 0.03125
    %v35 = vmul.f32 %v27, %v27
    %v36 = vmul.f32 %v28, %v28
    %37 = vadd.xlane.f32.xlu0 %v35
    %v38 = vpop.xlane.xlu0 %37
    %39 = vadd.xlane.f32.xlu0 %v36
    %v40 = vpop.xlane.xlu0 %39
    %v41 = vmul.f32 %v38, 0.03125
    %v42 = vmul.f32 %v40, 0.03125
    %v43 = vmul.f32 %v33, %v33
    %v44 = vmul.f32 %v34, %v34
    %v45 = vsub.f32 %v41, %v43
    %v46 = vsub.f32 %v42, %v44
    %v47 = vsub.f32 %v27, %v33
    %v48 = vsub.f32 %v28, %v34
    %v49 = vadd.f32 %v45, 1e-05
    %v50 = vadd.f32 %v46, 1e-05
    %v51 = vrsqrt.pop %v49
    %v52 = vrsqrt.pop %v50
    %v53 = vmul.f32 %v47, %v51
    %v54 = vmul.f32 %v48, %v52
    %v55 = vld [vmem:[%s3] sm:$0x1]
    %v57 = vlaneseq
    %v58 = vshrl.u32 %v57, 7
    %v59 = vsub.s32 0, %v58
    %v60 = vrot.slane %v55, %v59
    %v62 = vmul.f32 %v53, %v60
    %v63 = vmul.f32 %v54, %v60
    %v64 = vld [vmem:[%s4] sm:$0x1]
    %v66 = vlaneseq
    %v67 = vshrl.u32 %v66, 7
    %v68 = vsub.s32 0, %v67
    %v69 = vrot.slane %v64, %v68
    %v71 = vadd.f32 %v62, %v69
    %v72 = vadd.f32 %v63, %v69
    %v73 = vpack.c.bf16 %v72, %v71
    %74 = vst [vmem:[#allocation2] sm:$0xff] %v73
  $region25: #{jpt1_forward.16} parent=0 // pred_fallthru
    _
  %v75 = vld [vmem:[#allocation2] sm:$0xff]
  %v76 = vld [vmem:[%s1] sm:$0xf]
  %v77 = vld [vmem:[%s1 + $0x4] sm:$0xf]
  %v78 = vld [vmem:[%s1 + $0x8] sm:$0xf]
  %v79 = vld [vmem:[%s1 + $0xc] sm:$0xf]
  %v80 = vld [vmem:[%s1 + $0x10] sm:$0xf]
  %v81 = vld [vmem:[%s1 + $0x14] sm:$0xf]
  %v82 = vld [vmem:[%s1 + $0x18] sm:$0xf]
  %v83 = vld [vmem:[%s1 + $0x1c] sm:$0xf]
  %v84 = vld [vmem:[%s1 + $0x20] sm:$0xf]
  %v85 = vld [vmem:[%s1 + $0x24] sm:$0xf]
  %v86 = vld [vmem:[%s1 + $0x28] sm:$0xf]
  %v87 = vld [vmem:[%s1 + $0x2c] sm:$0xf]
  %v88 = vld [vmem:[%s1 + $0x30] sm:$0xf]
  %v89 = vld [vmem:[%s1 + $0x34] sm:$0xf]
  %v90 = vld [vmem:[%s1 + $0x38] sm:$0xf]
  %v91 = vld [vmem:[%s1 + $0x3c] sm:$0xf]
  %v92 = vld [vmem:[%s2] sm:$0x1]
  %v94 = vlaneseq
  %v95 = vshrl.u32 %v94, 7
  %v96 = vsub.s32 0, %v95
  %v97 = vrot.slane %v92, %v96
  %v115 = vunpack.c.l.b16 %v76
  %v116 = vunpack.c.l.b16 %v77
  %v117 = vunpack.c.l.b16 %v78
  %v118 = vunpack.c.l.b16 %v79
  %v119 = vunpack.c.l.b16 %v80
  %v120 = vunpack.c.l.b16 %v81
  %v121 = vunpack.c.l.b16 %v82
  %v122 = vunpack.c.l.b16 %v83
  %v123 = vunpack.c.l.b16 %v84
  %v124 = vunpack.c.l.b16 %v85
  %v125 = vunpack.c.l.b16 %v86
  %v126 = vunpack.c.l.b16 %v87
  %v127 = vunpack.c.l.b16 %v88
  %v128 = vunpack.c.l.b16 %v89
  %v129 = vunpack.c.l.b16 %v90
  %v130 = vunpack.c.l.b16 %v91
  %v131 = vpack.c.b16 %v116, %v115
  %v132 = vpack.c.b16 %v118, %v117
  %v133 = vpack.c.b16 %v120, %v119
  %v134 = vpack.c.b16 %v122, %v121
  %v135 = vpack.c.b16 %v124, %v123
  %v136 = vpack.c.b16 %v126, %v125
  %v137 = vpack.c.b16 %v128, %v127
  %v138 = vpack.c.b16 %v130, %v129
  %147 = vmatprep.subr.bf16.mxu0 0
  %148 = vmatpush1.bf16.msra.mxu0 %v131
  %149 = vmatprep.subr.bf16.mxu0 0
  %150 = vmatpush1.bf16.msra.mxu0 %v132
  %151 = vmatprep.subr.bf16.mxu0 0
  %152 = vmatpush1.bf16.msra.mxu0 %v133
  %153 = vmatprep.subr.bf16.mxu0 0
  %154 = vmatpush1.bf16.msra.mxu0 %v134
  %155 = vmatprep.subr.bf16.mxu0 0
  %156 = vmatpush1.bf16.msra.mxu0 %v135
  %157 = vmatprep.subr.bf16.mxu0 0
  %158 = vmatpush1.bf16.msra.mxu0 %v136
  %159 = vmatprep.subr.bf16.mxu0 0
  %160 = vmatpush1.bf16.msra.mxu0 %v137
  %161 = vmatprep.subr.bf16.mxu0 0
  %162 = vmatpush1.bf16.msra.mxu0 %v138
  %163 = vmatprep.subr.bf16.mxu0 0
  %164 = vmatpush1.bf16.msra.mxu0 0
  %165 = vmatprep.subr.bf16.mxu0 0
  %166 = vmatpush1.bf16.msra.mxu0 0
  %167 = vmatprep.subr.bf16.mxu0 0
  %168 = vmatpush1.bf16.msra.mxu0 0
  %169 = vmatprep.subr.bf16.mxu0 0
  %170 = vmatpush1.bf16.msra.mxu0 0
  %171 = vmatprep.subr.bf16.mxu0 0
  %172 = vmatpush1.bf16.msra.mxu0 0
  %173 = vmatprep.subr.bf16.mxu0 0
  %174 = vmatpush1.bf16.msra.mxu0 0
  %175 = vmatprep.subr.bf16.mxu0 0
  %176 = vmatpush1.bf16.msra.mxu0 0
  %177 = vmatprep.subr.bf16.mxu0 0
  %178 = vmatpush1.bf16.msra.mxu0 0
  %179 = vmatprep.mubr.bf16.mxu0 0
  %180 = vmatmul.mubr.bf16.gmra.mrb[0].mxu0 %v75
  %v181 = vpop.f32.mrb[0].mxu0
  %v182 = vadd.f32 %v97, %v181
  %v183 = vpop.f32.mrb[0].mxu0
  %v184 = vpop.f32.mrb[0].mxu0
  %v185 = vadd.f32 %v97, %v184
  %v186 = vpop.f32.mrb[0].mxu0
  %187 = vdwg.mxu0
  %v188 = vmax.f32 %v182, 0.0
  %v189 = vmax.f32 %v185, 0.0
  %v190 = vpack.c.bf16 %v189, %v188
  %v192 = vunpack.c.l.b16 %v190
  %v193 = vunpack.c.h.b16 %v190
  %v194 = vpack.c.b16 %v192, %v192
  %v195 = vpack.c.b16 %v193, %v193
  %198 = vst [vmem:[%s5] sm:$0xf] %v194
  %199 = vst [vmem:[%s5 + $0x4] sm:$0xf] %v195
  // Predicated region
  $region26: #{jpt1_forward.16} parent=0 // pred_check
    _
  $region27: #{jpt1_forward.16} parent=0 // pred_check_branch
    %201 = sbr.rel (0) target = $region29
  $region28: #{jpt1_forward.16} parent=0 // pred_region
    _
  $region29: #{jpt1_forward.16} parent=0 // pred_fallthru
    _
  // Predicated region
  $region30: #{jpt1_forward.16} parent=0 // pred_check
    _
  $region31: #{jpt1_forward.16} parent=0 // pred_check_branch
    %203 = sbr.rel (0) target = $region33
  $region32: #{jpt1_forward.16} parent=0 // pred_region
    _
  $region33: #{jpt1_forward.16} parent=0 // pred_fallthru
    _

// kernel: jpt1_forward.23
$region0: #{jpt1_forward.23}
  #allocation0 [shape = 'u32[]', space=smem, size = 0x4, offset = 0x4, fixed_abs, tag = 'smem constant byte address 0x4 - core index']
  #allocation1 [shape = 'u32[144,128]{1,0:T(1,128)}', space=vmem, size = 0x12000, scoped, tag = 'internal scratch']
  #allocation2 [shape = 'bf16[16,128]{1,0:T(16,128)(2,1)}', space=vmem, size = 0x1000, scoped, tag = 'scratch operand']
  %s0 = inlined_call_operand.vmem [shape: bf16[16,128], index: 0, kind: input, shape index: {}]
  %s1 = inlined_call_operand.vmem [shape: bf16[128,128], index: 1, kind: input, shape index: {}]
  %s2 = inlined_call_operand.vmem [shape: f32[1,128], index: 2, kind: input, shape index: {}]
  %s3 = inlined_call_operand.vmem [shape: f32[1,128], index: 3, kind: input, shape index: {}]
  %s4 = inlined_call_operand.vmem [shape: f32[1,128], index: 4, kind: input, shape index: {}]
  %s5 = inlined_call_operand.vmem [shape: f32[16,128], index: 5, kind: output, shape index: {}]
  %s6 = sld [smem:[#allocation0]]
  $region34: #{jpt1_forward.23} parent=0
    _
  %s8 = ssub.s32 1, %s6
  %s9 = scalar_select 0, %s8, %s6
  // Predicated region
  $region2: #{jpt1_forward.23} parent=0 // pred_check
    _
  $region3: #{jpt1_forward.23} parent=0 // pred_check_branch
    %11 = sbr.rel (0) target = $region5
  $region4: #{jpt1_forward.23} parent=0 // pred_region
    _
  $region5: #{jpt1_forward.23} parent=0 // pred_fallthru
    _
  // Predicated region
  $region6: #{jpt1_forward.23} parent=0 // pred_check
    _
  $region7: #{jpt1_forward.23} parent=0 // pred_check_branch
    %13 = sbr.rel (0) target = $region9
  $region8: #{jpt1_forward.23} parent=0 // pred_region
    _
  $region9: #{jpt1_forward.23} parent=0 // pred_fallthru
    _
  // Predicated region
  $region10: #{jpt1_forward.23} parent=0 // pred_check
    _
  $region11: #{jpt1_forward.23} parent=0 // pred_check_branch
    %15 = sbr.rel (0) target = $region13
  $region12: #{jpt1_forward.23} parent=0 // pred_region
    _
  $region13: #{jpt1_forward.23} parent=0 // pred_fallthru
    _
  // Predicated region
  $region14: #{jpt1_forward.23} parent=0 // pred_check
    _
  $region15: #{jpt1_forward.23} parent=0 // pred_check_branch
    %17 = sbr.rel (0) target = $region17
  $region16: #{jpt1_forward.23} parent=0 // pred_region
    _
  $region17: #{jpt1_forward.23} parent=0 // pred_fallthru
    _
  // Predicated region
  $region18: #{jpt1_forward.23} parent=0 // pred_check
    _
  $region19: #{jpt1_forward.23} parent=0 // pred_check_branch
    %19 = sbr.rel (0) target = $region21
  $region20: #{jpt1_forward.23} parent=0 // pred_region
    _
  $region21: #{jpt1_forward.23} parent=0 // pred_fallthru
    _
  %p21 = scmp.eq.s32.totalorder 0, 0
  // Predicated region
  $region22: #{jpt1_forward.23} parent=0 // pred_check
    %p22 = pneg %p21
  $region23: #{jpt1_forward.23} parent=0 // pred_check_branch
    %24 = sbr.rel (%p22) target = $region25
  $region24: #{jpt1_forward.23} parent=0 // pred_region
    %v25 = vld [vmem:[%s0] sm:$0xf]
    %v26 = vld [vmem:[%s0 + $0x4] sm:$0xf]
    %v27 = vunpack.c.l.bf16 %v25
    %v28 = vunpack.c.l.bf16 %v26
    %29 = vadd.xlane.f32.xlu0 %v27
    %v30 = vpop.xlane.xlu0 %29
    %31 = vadd.xlane.f32.xlu0 %v28
    %v32 = vpop.xlane.xlu0 %31
    %v33 = vmul.f32 %v30, 0.03125
    %v34 = vmul.f32 %v32, 0.03125
    %v35 = vmul.f32 %v27, %v27
    %v36 = vmul.f32 %v28, %v28
    %37 = vadd.xlane.f32.xlu0 %v35
    %v38 = vpop.xlane.xlu0 %37
    %39 = vadd.xlane.f32.xlu0 %v36
    %v40 = vpop.xlane.xlu0 %39
    %v41 = vmul.f32 %v38, 0.03125
    %v42 = vmul.f32 %v40, 0.03125
    %v43 = vmul.f32 %v33, %v33
    %v44 = vmul.f32 %v34, %v34
    %v45 = vsub.f32 %v41, %v43
    %v46 = vsub.f32 %v42, %v44
    %v47 = vsub.f32 %v27, %v33
    %v48 = vsub.f32 %v28, %v34
    %v49 = vadd.f32 %v45, 1e-05
    %v50 = vadd.f32 %v46, 1e-05
    %v51 = vrsqrt.pop %v49
    %v52 = vrsqrt.pop %v50
    %v53 = vmul.f32 %v47, %v51
    %v54 = vmul.f32 %v48, %v52
    %v55 = vld [vmem:[%s3] sm:$0x1]
    %v57 = vlaneseq
    %v58 = vshrl.u32 %v57, 7
    %v59 = vsub.s32 0, %v58
    %v60 = vrot.slane %v55, %v59
    %v62 = vmul.f32 %v53, %v60
    %v63 = vmul.f32 %v54, %v60
    %v64 = vld [vmem:[%s4] sm:$0x1]
    %v66 = vlaneseq
    %v67 = vshrl.u32 %v66, 7
    %v68 = vsub.s32 0, %v67
    %v69 = vrot.slane %v64, %v68
    %v71 = vadd.f32 %v62, %v69
    %v72 = vadd.f32 %v63, %v69
    %v73 = vpack.c.bf16 %v72, %v71
    %74 = vst [vmem:[#allocation2] sm:$0xff] %v73
  $region25: #{jpt1_forward.23} parent=0 // pred_fallthru
    _
  %v75 = vld [vmem:[#allocation2] sm:$0xff]
  %v76 = vld [vmem:[%s1] sm:$0xf]
  %v77 = vld [vmem:[%s1 + $0x4] sm:$0xf]
  %v78 = vld [vmem:[%s1 + $0x8] sm:$0xf]
  %v79 = vld [vmem:[%s1 + $0xc] sm:$0xf]
  %v80 = vld [vmem:[%s1 + $0x10] sm:$0xf]
  %v81 = vld [vmem:[%s1 + $0x14] sm:$0xf]
  %v82 = vld [vmem:[%s1 + $0x18] sm:$0xf]
  %v83 = vld [vmem:[%s1 + $0x1c] sm:$0xf]
  %v84 = vld [vmem:[%s1 + $0x20] sm:$0xf]
  %v85 = vld [vmem:[%s1 + $0x24] sm:$0xf]
  %v86 = vld [vmem:[%s1 + $0x28] sm:$0xf]
  %v87 = vld [vmem:[%s1 + $0x2c] sm:$0xf]
  %v88 = vld [vmem:[%s1 + $0x30] sm:$0xf]
  %v89 = vld [vmem:[%s1 + $0x34] sm:$0xf]
  %v90 = vld [vmem:[%s1 + $0x38] sm:$0xf]
  %v91 = vld [vmem:[%s1 + $0x3c] sm:$0xf]
  %v92 = vld [vmem:[%s2] sm:$0x1]
  %v94 = vlaneseq
  %v95 = vshrl.u32 %v94, 7
  %v96 = vsub.s32 0, %v95
  %v97 = vrot.slane %v92, %v96
  %v115 = vunpack.c.l.b16 %v76
  %v116 = vunpack.c.l.b16 %v77
  %v117 = vunpack.c.l.b16 %v78
  %v118 = vunpack.c.l.b16 %v79
  %v119 = vunpack.c.l.b16 %v80
  %v120 = vunpack.c.l.b16 %v81
  %v121 = vunpack.c.l.b16 %v82
  %v122 = vunpack.c.l.b16 %v83
  %v123 = vunpack.c.l.b16 %v84
  %v124 = vunpack.c.l.b16 %v85
  %v125 = vunpack.c.l.b16 %v86
  %v126 = vunpack.c.l.b16 %v87
  %v127 = vunpack.c.l.b16 %v88
  %v128 = vunpack.c.l.b16 %v89
  %v129 = vunpack.c.l.b16 %v90
  %v130 = vunpack.c.l.b16 %v91
  %v131 = vpack.c.b16 %v116, %v115
  %v132 = vpack.c.b16 %v118, %v117
  %v133 = vpack.c.b16 %v120, %v119
  %v134 = vpack.c.b16 %v122, %v121
  %v135 = vpack.c.b16 %v124, %v123
  %v136 = vpack.c.b16 %v126, %v125
  %v137 = vpack.c.b16 %v128, %v127
  %v138 = vpack.c.b16 %v130, %v129
  %147 = vmatprep.subr.bf16.mxu0 0
  %148 = vmatpush1.bf16.msra.mxu0 %v131
  %149 = vmatprep.subr.bf16.mxu0 0
  %150 = vmatpush1.bf16.msra.mxu0 %v132
  %151 = vmatprep.subr.bf16.mxu0 0
  %152 = vmatpush1.bf16.msra.mxu0 %v133
  %153 = vmatprep.subr.bf16.mxu0 0
  %154 = vmatpush1.bf16.msra.mxu0 %v134
  %155 = vmatprep.subr.bf16.mxu0 0
  %156 = vmatpush1.bf16.msra.mxu0 %v135
  %157 = vmatprep.subr.bf16.mxu0 0
  %158 = vmatpush1.bf16.msra.mxu0 %v136
  %159 = vmatprep.subr.bf16.mxu0 0
  %160 = vmatpush1.bf16.msra.mxu0 %v137
  %161 = vmatprep.subr.bf16.mxu0 0
  %162 = vmatpush1.bf16.msra.mxu0 %v138
  %163 = vmatprep.subr.bf16.mxu0 0
  %164 = vmatpush1.bf16.msra.mxu0 0
  %165 = vmatprep.subr.bf16.mxu0 0
  %166 = vmatpush1.bf16.msra.mxu0 0
  %167 = vmatprep.subr.bf16.mxu0 0
  %168 = vmatpush1.bf16.msra.mxu0 0
  %169 = vmatprep.subr.bf16.mxu0 0
  %170 = vmatpush1.bf16.msra.mxu0 0
  %171 = vmatprep.subr.bf16.mxu0 0
  %172 = vmatpush1.bf16.msra.mxu0 0
  %173 = vmatprep.subr.bf16.mxu0 0
  %174 = vmatpush1.bf16.msra.mxu0 0
  %175 = vmatprep.subr.bf16.mxu0 0
  %176 = vmatpush1.bf16.msra.mxu0 0
  %177 = vmatprep.subr.bf16.mxu0 0
  %178 = vmatpush1.bf16.msra.mxu0 0
  %179 = vmatprep.mubr.bf16.mxu0 0
  %180 = vmatmul.mubr.bf16.gmra.mrb[0].mxu0 %v75
  %v181 = vpop.f32.mrb[0].mxu0
  %v182 = vadd.f32 %v97, %v181
  %v183 = vpop.f32.mrb[0].mxu0
  %v184 = vpop.f32.mrb[0].mxu0
  %v185 = vadd.f32 %v97, %v184
  %v186 = vpop.f32.mrb[0].mxu0
  %187 = vdwg.mxu0
  %188 = vst [vmem:[%s5] sm:$0xff] %v182
  %189 = vst [vmem:[%s5 + $0x8] sm:$0xff] %v185
  // Predicated region
  $region26: #{jpt1_forward.23} parent=0 // pred_check
    _
  $region27: #{jpt1_forward.23} parent=0 // pred_check_branch
    %191 = sbr.rel (0) target = $region29
  $region28: #{jpt1_forward.23} parent=0 // pred_region
    _
  $region29: #{jpt1_forward.23} parent=0 // pred_fallthru
    _
  // Predicated region
  $region30: #{jpt1_forward.23} parent=0 // pred_check
    _
  $region31: #{jpt1_forward.23} parent=0 // pred_check_branch
    %193 = sbr.rel (0) target = $region33
  $region32: #{jpt1_forward.23} parent=0 // pred_region
    _
  $region33: #{jpt1_forward.23} parent=0 // pred_fallthru
    _

</llo_original>
